<compile_context>
chip_gen: v5e
topology: v5e:2x2
jax: 0.10.0
libtpu: 0.0.40
codegen_flags: <defaults>
</compile_context>

<pallas_src>
import functools

import jax
import jax.numpy as jnp
from jax.experimental import pallas as pl
from jax.experimental.pallas import tpu as pltpu


def gated_attn_kernel(x_ref, wab_ref, bab_ref, wc_ref, bc_ref, a_out_ref,
                      *, D, reduce_c):
    x = x_ref[...]                                             # (TN, L)
    # Fused gate projections: one MXU matmul -> (TN, 2D), f32 accumulation.
    h = jnp.dot(x, wab_ref[...], preferred_element_type=jnp.float32) \
        + bab_ref[...]                                         # (TN, 2D) f32
    a = jnp.tanh(h[:, :D])                                     # (TN, D)
    gate = jax.nn.sigmoid(h[:, D:])                            # (TN, D)
    ab = a * gate                                              # (TN, D) f32

    if reduce_c:
        # num_classes == 1: a width-1 MXU matmul wastes the systolic array,
        # so do a lane reduce instead.  wc_ref is pre-transposed to (1, D).
        A = jnp.sum(ab * wc_ref[...], axis=-1, keepdims=True) + bc_ref[...]
    else:
        A = jnp.dot(ab, wc_ref[...], preferred_element_type=jnp.float32) \
            + bc_ref[...]                                      # (TN, C)

    a_out_ref[...] = A.astype(a_out_ref.dtype)


def _default_tile_n(n):
    # A few hundred rows per tile (multiple of 128), keeping >= 2 grid steps
    # when possible so v7x's two TensorCores both get work.
    for cand in (1024, 512, 256, 128):
        if n >= 2 * cand:
            return cand
    return 128


def attn_net_gated(x, wa, ba, wb, bb, wc, bc, *, tile_n=None,
                   compute_dtype=None, vmem_limit_bytes=None):
    """Returns (A, x) exactly like the PyTorch module.

    x : (N, L); wa, wb : (L, D); ba, bb : (1, D); wc : (D, C); bc : (1, C).
    Weights are stored pre-transposed relative to nn.Linear.weight.
    compute_dtype: optional (e.g. jnp.bfloat16) dtype for x / fused gate
    weights fed to the MXU; accumulation and activations stay f32.
    """
    N, L = x.shape
    D = wa.shape[1]
    C = wc.shape[1]
    reduce_c = (C == 1)

    # Fuse the two gate projections into a single (L, 2D) weight / bias.
    wab = jnp.concatenate([wa, wb], axis=1)                    # (L, 2D)
    bab = jnp.concatenate([ba, bb], axis=1).astype(jnp.float32)  # (1, 2D)

    x_in = x
    if compute_dtype is not None:
        x_in = x_in.astype(compute_dtype)
        wab = wab.astype(compute_dtype)
    wc_in = wc.T.astype(jnp.float32) if reduce_c else wc.astype(jnp.float32)
    bc_in = bc.astype(jnp.float32)

    if tile_n is None:
        tile_n = _default_tile_n(N)

    # cdiv-based grid: pad the row dimension so any N works.
    n_tiles = pl.cdiv(N, tile_n)
    N_pad = n_tiles * tile_n
    if N_pad != N:
        x_in = jnp.pad(x_in, ((0, N_pad - N), (0, 0)))

    # VMEM budget: double-buffered in/out tiles + f32 intermediates, with
    # margin; capped at 48 MiB so it also fits v7x's 64 MiB VMEM.
    if vmem_limit_bytes is None:
        itemsize = jnp.dtype(x_in.dtype).itemsize
        est = 2 * (tile_n * L + L * 2 * D + tile_n * C) * itemsize  # dbl-buffered
        est += tile_n * 4 * D * 4                                   # f32 temps
        vmem_limit_bytes = int(min(max(3 * est, 16 * 1024 * 1024),
                                   48 * 1024 * 1024))

    x_spec = pl.BlockSpec((tile_n, L), lambda i: (i, 0))
    wab_spec = pl.BlockSpec((L, 2 * D), lambda i: (0, 0))
    bab_spec = pl.BlockSpec((1, 2 * D), lambda i: (0, 0))
    wc_spec = pl.BlockSpec(wc_in.shape, lambda i: (0, 0))
    bc_spec = pl.BlockSpec((1, C), lambda i: (0, 0))
    A_spec = pl.BlockSpec((tile_n, C), lambda i: (i, 0))

    kernel = functools.partial(gated_attn_kernel, D=D, reduce_c=reduce_c)

    A = pl.pallas_call(
        kernel,
        out_shape=jax.ShapeDtypeStruct((N_pad, C), jnp.float32),
        grid_spec=pltpu.PrefetchScalarGridSpec(
            num_scalar_prefetch=0,
            grid=(n_tiles,),
            in_specs=[x_spec, wab_spec, bab_spec, wc_spec, bc_spec],
            out_specs=A_spec,
        ),
        compiler_params=pltpu.CompilerParams(
            dimension_semantics=("parallel",),
            vmem_limit_bytes=vmem_limit_bytes),
    )(x_in, wab, bab, wc_in, bc_in)

    if N_pad != N:
        A = A[:N]
    # The reference returns x unchanged — no need to route it through VMEM.
    return A, x


if __name__ == "__main__":
    # Small (but vreg/MXU-aligned) shapes consistent with the module:
    # N instances, L input features, D hidden, C=num_classes.
    N, L, D, C = 512, 256, 128, 1

    key = jax.random.PRNGKey(0)
    kx, kwa, kba, kwb, kbb, kwc, kbc = jax.random.split(key, 7)

    x = jax.random.normal(kx, (N, L), dtype=jnp.float32)

    # nn.Linear-style uniform init, deterministic; weights stored transposed.
    def lin_init(kw, kb, fan_in, fan_out):
        bound = 1.0 / (fan_in ** 0.5)
        w = jax.random.uniform(kw, (fan_in, fan_out), jnp.float32, -bound, bound)
        b = jax.random.uniform(kb, (1, fan_out), jnp.float32, -bound, bound)
        return w, b

    wa, ba = lin_init(kwa, kba, L, D)   # attention_a Linear(L, D)
    wb, bb = lin_init(kwb, kbb, L, D)   # attention_b Linear(L, D)
    wc, bc = lin_init(kwc, kbc, D, C)   # attention_c Linear(D, C)

    # f32 path (matches the PyTorch reference numerics).
    A, x_out = attn_net_gated(x, wa, ba, wb, bb, wc, bc)
    A = jax.block_until_ready(A)

    # Reference check (pure JAX), same math as the PyTorch forward.
    a_ref = jnp.tanh(x @ wa + ba)
    b_ref = jax.nn.sigmoid(x @ wb + bb)
    A_ref = (a_ref * b_ref) @ wc + bc
    assert jnp.allclose(A, A_ref, atol=1e-5, rtol=1e-5)
    assert x_out is x  # passthrough, no copy

    # bf16 MXU path (halved HBM bytes, f32 accumulation) — loose tolerance.
    A_bf16, _ = attn_net_gated(x, wa, ba, wb, bb, wc, bc,
                               compute_dtype=jnp.bfloat16)
    A_bf16 = jax.block_until_ready(A_bf16)
    assert jnp.allclose(A_bf16, A_ref, atol=5e-2, rtol=5e-2)

    # Non-divisible N (exercises cdiv padding path).
    A_odd, _ = attn_net_gated(x[:300], wa, ba, wb, bb, wc, bc, tile_n=128)
    A_odd = jax.block_until_ready(A_odd)
    assert jnp.allclose(A_odd, A_ref[:300], atol=1e-5, rtol=1e-5)

    print("KERNEL_OK")
</pallas_src>

<mosaic_0001>
module attributes {stable_mosaic.version = 11 : i64} {
  func.func @gated_attn_kernel(%arg0: i32, %arg1: memref<256x256xf32, #tpu.memory_space<vmem>>, %arg2: memref<256x256xf32, #tpu.memory_space<vmem>>, %arg3: memref<1x256xf32, #tpu.memory_space<vmem>>, %arg4: memref<1x128xf32, #tpu.memory_space<vmem>>, %arg5: memref<1x1xf32, #tpu.memory_space<vmem>>, %arg6: memref<256x1xf32, #tpu.memory_space<vmem>>) attributes {dimension_semantics = [#tpu.dimension_semantics<parallel>], iteration_bounds = array<i64: 2>, scalar_prefetch = 0 : i64, scratch_operands = 0 : i64, tpu.core_type = #tpu.core_type<tc>, window_params = [{transform_indices = @transform_0, window_bounds = array<i64: 256, 256>}, {pipeline_mode = #tpu.pipeline_mode<synchronous>, transform_indices = @transform_1, window_bounds = array<i64: 256, 256>}, {pipeline_mode = #tpu.pipeline_mode<synchronous>, transform_indices = @transform_2, window_bounds = array<i64: 1, 256>}, {pipeline_mode = #tpu.pipeline_mode<synchronous>, transform_indices = @transform_3, window_bounds = array<i64: 1, 128>}, {pipeline_mode = #tpu.pipeline_mode<synchronous>, transform_indices = @transform_4, window_bounds = array<i64: 1, 1>}, {transform_indices = @transform_5, window_bounds = array<i64: 256, 1>}]} {
    %c0 = arith.constant 0 : index
    %c0_0 = arith.constant 0 : index
    %0 = vector.load %arg1[%c0, %c0_0] : memref<256x256xf32, #tpu.memory_space<vmem>>, vector<256x256xf32>
    %c0_1 = arith.constant 0 : index
    %c0_2 = arith.constant 0 : index
    %1 = vector.load %arg2[%c0_1, %c0_2] : memref<256x256xf32, #tpu.memory_space<vmem>>, vector<256x256xf32>
    %cst = arith.constant dense<0.000000e+00> : vector<256x256xf32>
    %2 = tpu.matmul %0, %1, %cst {dimension_numbers = #tpu.dot_dimension_numbers<[1], [0], [0], [1], [0, 0, 1, 1], [], []>} : vector<256x256xf32>, vector<256x256xf32>, vector<256x256xf32> -> vector<256x256xf32>
    %c0_3 = arith.constant 0 : index
    %c0_4 = arith.constant 0 : index
    %3 = vector.load %arg3[%c0_3, %c0_4] : memref<1x256xf32, #tpu.memory_space<vmem>>, vector<1x256xf32>
    %4 = vector.broadcast %3 : vector<1x256xf32> to vector<256x256xf32>
    %5 = arith.addf %2, %4 : vector<256x256xf32>
    %6 = vector.extract_strided_slice %5 {offsets = [0, 0], sizes = [256, 128], strides = [1, 1]} : vector<256x256xf32> to vector<256x128xf32>
    %7 = math.tanh %6 : vector<256x128xf32>
    %8 = vector.extract_strided_slice %5 {offsets = [0, 128], sizes = [256, 128], strides = [1, 1]} : vector<256x256xf32> to vector<256x128xf32>
    %9 = arith.negf %8 : vector<256x128xf32>
    %10 = math.exp %9 : vector<256x128xf32>
    %cst_5 = arith.constant 1.000000e+00 : f32
    %11 = vector.broadcast %cst_5 : f32 to vector<256x128xf32>
    %12 = arith.addf %11, %10 : vector<256x128xf32>
    %13 = arith.divf %11, %12 : vector<256x128xf32>
    %14 = arith.mulf %7, %13 : vector<256x128xf32>
    %c0_6 = arith.constant 0 : index
    %c0_7 = arith.constant 0 : index
    %15 = vector.load %arg4[%c0_6, %c0_7] : memref<1x128xf32, #tpu.memory_space<vmem>>, vector<1x128xf32>
    %16 = vector.broadcast %15 : vector<1x128xf32> to vector<256x128xf32>
    %17 = arith.mulf %14, %16 : vector<256x128xf32>
    %cst_8 = arith.constant dense<0.000000e+00> : vector<256xf32>
    %18 = vector.multi_reduction <add>, %17, %cst_8 [1] : vector<256x128xf32> to vector<256xf32>
    %19 = vector.shape_cast %18 : vector<256xf32> to vector<256x1xf32>
    %c0_9 = arith.constant 0 : index
    %c0_10 = arith.constant 0 : index
    %20 = vector.load %arg5[%c0_9, %c0_10] : memref<1x1xf32, #tpu.memory_space<vmem>>, vector<1x1xf32>
    %21 = vector.broadcast %20 : vector<1x1xf32> to vector<256x1xf32>
    %22 = arith.addf %19, %21 : vector<256x1xf32>
    %c0_11 = arith.constant 0 : index
    %c0_12 = arith.constant 0 : index
    %23 = vector.load %arg6[%c0_11, %c0_12] : memref<256x1xf32, #tpu.memory_space<vmem>>, vector<256x1xf32>
    tpu.vector_store %arg6[%c0_11, %c0_12], %22 {strides = array<i32>} : memref<256x1xf32, #tpu.memory_space<vmem>>, vector<256x1xf32>,
    return
  }
  func.func @transform_0(%arg0: i32) -> (i32, i32) {
    %c0_i32 = arith.constant 0 : i32
    %c0_i32_0 = arith.constant 0 : i32
    return %arg0, %c0_i32 : i32, i32
  }
  func.func @transform_1(%arg0: i32) -> (i32, i32) {
    %c0_i32 = arith.constant 0 : i32
    %c0_i32_0 = arith.constant 0 : i32
    %c0_i32_1 = arith.constant 0 : i32
    return %c0_i32, %c0_i32_0 : i32, i32
  }
  func.func @transform_2(%arg0: i32) -> (i32, i32) {
    %c0_i32 = arith.constant 0 : i32
    %c0_i32_0 = arith.constant 0 : i32
    %c0_i32_1 = arith.constant 0 : i32
    return %c0_i32, %c0_i32_0 : i32, i32
  }
  func.func @transform_3(%arg0: i32) -> (i32, i32) {
    %c0_i32 = arith.constant 0 : i32
    %c0_i32_0 = arith.constant 0 : i32
    %c0_i32_1 = arith.constant 0 : i32
    return %c0_i32, %c0_i32_0 : i32, i32
  }
  func.func @transform_4(%arg0: i32) -> (i32, i32) {
    %c0_i32 = arith.constant 0 : i32
    %c0_i32_0 = arith.constant 0 : i32
    %c0_i32_1 = arith.constant 0 : i32
    return %c0_i32, %c0_i32_0 : i32, i32
  }
  func.func @transform_5(%arg0: i32) -> (i32, i32) {
    %c0_i32 = arith.constant 0 : i32
    %c0_i32_0 = arith.constant 0 : i32
    return %arg0, %c0_i32 : i32, i32
  }
}

</mosaic_0001>

<llo_original>
// kernel: tpu_custom_call.1
$region0: #{tpu_custom_call.1}
  #allocation0 [shape = 'u32[]', space=smem, size = 0x4, offset = 0x4, fixed_abs, tag = 'smem constant byte address 0x4 - core index']
  #allocation1 [shape = 'u32[72,128]{1,0:T(1,128)}', space=vmem, size = 0x9000, scoped, tag = 'internal scratch']
  #allocation2 [shape = 'f32[1,1]{1,0:T(1,128)S(1)}', space=vmem, size = 0x200, scoped, tag = 'scoped memory for tpu_custom_call.1']
  %s0 = inlined_call_operand.hbm [shape: f32[512,256], index: 0, kind: input, shape index: {}]
  %s1 = inlined_call_operand.hbm [shape: f32[256,256], index: 1, kind: input, shape index: {}]
  %s2 = inlined_call_operand.vmem [shape: f32[1,256], index: 2, kind: input, shape index: {}]
  %s3 = inlined_call_operand.vmem [shape: f32[1,128], index: 3, kind: input, shape index: {}]
  %s4 = inlined_call_operand.<no memory space> [shape: f32[1,1], index: 4, kind: input, shape index: {}]
  %s5 = inlined_call_operand.vmem [shape: f32[512,1], index: 5, kind: output, shape index: {}]
  %s6 = sld [smem:[#allocation0]]
  $region61: #{tpu_custom_call.1} parent=0
    _
  %s8 = ssub.s32 1, %s6
  %s9 = scalar_select 0, %s8, %s6
  %v10 = vstv %s4
  %11 = vst [vmem:[#allocation2] sm:$0x1] %v10
  $region1: #{tpu_custom_call.1} parent=0
    #allocation3 [shape = 'u8[524288]{0}', space=vmem, size = 0x80000, scoped, tag = 'input window, operand 0']
    #allocation4 [shape = 's32[2]{0}', space=sflag, size = 0x8, scoped, tag = 'scoped memory for tpu_custom_call.1']
    #allocation5 [shape = 'u8[262144]{0}', space=vmem, size = 0x40000, scoped, tag = 'input window, operand 1, single buffered']
    #allocation6 [shape = 's32[1]{0}', space=sflag, size = 0x4, scoped, tag = 'scoped memory for tpu_custom_call.1']
    %12 = vsyncpa [#allocation4], 0
    %s13 = scalar_lea.sflag [#allocation4], 1
    %14 = vsyncpa %s13, 0
    %15 = vsyncpa [#allocation6], 0
    loop: start=0, step=1, limit=4
    $region2: #{tpu_custom_call.1} parent=1 // loop_pre_header
      _
    $region3: #{tpu_custom_call.1} parent=1 // loop_header
      %s17 = sphi 0, %s21
      %p18 = scmp.ge.s32.totalorder %s17, 4
      %s27 = sphi 0, %s29
      %s30 = sphi 0, %s27
      %s31 = sphi 0, %s30
      %s47 = sphi 0, %s31
      %s51 = sphi 0, %s51
      %s53 = sphi 0, %s51
      %s54 = sphi 0, %s53
      %s68 = sphi 0, %s54
      %s72 = sphi 0, %s72
      %s74 = sphi 0, %s72
      %s75 = sphi 0, %s74
      %s89 = sphi 0, %s75
      %s93 = sphi 0, %s93
      %s95 = sphi 0, %s93
      %s96 = sphi 0, %s95
      %s110 = sphi 0, %s96
      %s114 = sphi 0, %s114
      %s116 = sphi 0, %s114
      %s117 = sphi 0, %s116
      %s131 = sphi 0, %s117
      %s137 = sphi 0, %s139
      %s140 = sphi 0, %s137
      %s141 = sphi 0, %s140
      %s157 = sphi 0, %s141
    $region4: #{tpu_custom_call.1} parent=1 // loop_header_branch
      %20 = sbr.rel (%p18) target = $region8
    $region5: #{tpu_custom_call.1} parent=1 // loop_body
      %s22 = ssub.s32 %s17, 1
      %s23 = ssub.s32 %s17, 2
      %s24 = sadd.s32 %s17, 1
      %s25 = ssub.s32 %s17, %s24
      %p26 = scmp.eq.s32.totalorder %s25, 0
      %s28 = sadd.s32 %s27, 1
      %s29 = scalar_select %p26, %s27, %s28
      %p32 = pneg %p26
      %p33 = scmp.eq.s32.totalorder %s17, 1
      %p34 = por %p32, %p33
      %p35 = scmp.ne.s32.totalorder %s27, %s30
      %p36 = scmp.eq.s32.totalorder %s17, 0
      %p37 = por %p35, %p36
      %p38 = scmp.ne.s32.totalorder %s27, %s30
      %p39 = scmp.eq.s32.totalorder %s22, 1
      %p40 = por %p38, %p39
      %p41 = scmp.ne.s32.totalorder %s30, %s31
      %p42 = scmp.eq.s32.totalorder %s22, 0
      %p43 = por %p41, %p42
      %p44 = scmp.ne.s32.totalorder %s30, %s31
      %p45 = scmp.eq.s32.totalorder %s23, 1
      %p46 = por %p44, %p45
      %p48 = scmp.ne.s32.totalorder %s31, %s47
      %p49 = scmp.eq.s32.totalorder %s23, 0
      %p50 = por %p48, %p49
      %s52 = sadd.s32 %s51, 1
      %p55 = scmp.eq.s32.totalorder %s17, 1
      %p56 = scmp.ne.s32.totalorder %s51, %s53
      %p57 = scmp.eq.s32.totalorder %s17, 0
      %p58 = por %p56, %p57
      %p59 = scmp.ne.s32.totalorder %s51, %s53
      %p60 = scmp.eq.s32.totalorder %s22, 1
      %p61 = por %p59, %p60
      %p62 = scmp.ne.s32.totalorder %s53, %s54
      %p63 = scmp.eq.s32.totalorder %s22, 0
      %p64 = por %p62, %p63
      %p65 = scmp.ne.s32.totalorder %s53, %s54
      %p66 = scmp.eq.s32.totalorder %s23, 1
      %p67 = por %p65, %p66
      %p69 = scmp.ne.s32.totalorder %s54, %s68
      %p70 = scmp.eq.s32.totalorder %s23, 0
      %p71 = por %p69, %p70
      %s73 = sadd.s32 %s72, 1
      %p76 = scmp.eq.s32.totalorder %s17, 1
      %p77 = scmp.ne.s32.totalorder %s72, %s74
      %p78 = scmp.eq.s32.totalorder %s17, 0
      %p79 = por %p77, %p78
      %p80 = scmp.ne.s32.totalorder %s72, %s74
      %p81 = scmp.eq.s32.totalorder %s22, 1
      %p82 = por %p80, %p81
      %p83 = scmp.ne.s32.totalorder %s74, %s75
      %p84 = scmp.eq.s32.totalorder %s22, 0
      %p85 = por %p83, %p84
      %p86 = scmp.ne.s32.totalorder %s74, %s75
      %p87 = scmp.eq.s32.totalorder %s23, 1
      %p88 = por %p86, %p87
      %p90 = scmp.ne.s32.totalorder %s75, %s89
      %p91 = scmp.eq.s32.totalorder %s23, 0
      %p92 = por %p90, %p91
      %s94 = sadd.s32 %s93, 1
      %p97 = scmp.eq.s32.totalorder %s17, 1
      %p98 = scmp.ne.s32.totalorder %s93, %s95
      %p99 = scmp.eq.s32.totalorder %s17, 0
      %p100 = por %p98, %p99
      %p101 = scmp.ne.s32.totalorder %s93, %s95
      %p102 = scmp.eq.s32.totalorder %s22, 1
      %p103 = por %p101, %p102
      %p104 = scmp.ne.s32.totalorder %s95, %s96
      %p105 = scmp.eq.s32.totalorder %s22, 0
      %p106 = por %p104, %p105
      %p107 = scmp.ne.s32.totalorder %s95, %s96
      %p108 = scmp.eq.s32.totalorder %s23, 1
      %p109 = por %p107, %p108
      %p111 = scmp.ne.s32.totalorder %s96, %s110
      %p112 = scmp.eq.s32.totalorder %s23, 0
      %p113 = por %p111, %p112
      %s115 = sadd.s32 %s114, 1
      %p118 = scmp.eq.s32.totalorder %s17, 1
      %p119 = scmp.ne.s32.totalorder %s114, %s116
      %p120 = scmp.eq.s32.totalorder %s17, 0
      %p121 = por %p119, %p120
      %p122 = scmp.ne.s32.totalorder %s114, %s116
      %p123 = scmp.eq.s32.totalorder %s22, 1
      %p124 = por %p122, %p123
      %p125 = scmp.ne.s32.totalorder %s116, %s117
      %p126 = scmp.eq.s32.totalorder %s22, 0
      %p127 = por %p125, %p126
      %p128 = scmp.ne.s32.totalorder %s116, %s117
      %p129 = scmp.eq.s32.totalorder %s23, 1
      %p130 = por %p128, %p129
      %p132 = scmp.ne.s32.totalorder %s117, %s131
      %p133 = scmp.eq.s32.totalorder %s23, 0
      %p134 = por %p132, %p133
      %s135 = ssub.s32 %s17, %s24
      %p136 = scmp.eq.s32.totalorder %s135, 0
      %s138 = sadd.s32 %s137, 1
      %s139 = scalar_select %p136, %s137, %s138
      %p142 = pneg %p136
      %p143 = scmp.eq.s32.totalorder %s17, 1
      %p144 = por %p142, %p143
      %p145 = scmp.ne.s32.totalorder %s137, %s140
      %p146 = scmp.eq.s32.totalorder %s17, 0
      %p147 = por %p145, %p146
      %p148 = scmp.ne.s32.totalorder %s137, %s140
      %p149 = scmp.eq.s32.totalorder %s22, 1
      %p150 = por %p148, %p149
      %p151 = scmp.ne.s32.totalorder %s140, %s141
      %p152 = scmp.eq.s32.totalorder %s22, 0
      %p153 = por %p151, %p152
      %p154 = scmp.ne.s32.totalorder %s140, %s141
      %p155 = scmp.eq.s32.totalorder %s23, 1
      %p156 = por %p154, %p155
      %p158 = scmp.ne.s32.totalorder %s141, %s157
      %p159 = scmp.eq.s32.totalorder %s23, 0
      %p160 = por %p158, %p159
      %p161 = scmp.le.s32.totalorder 1, %s17
      %p162 = scmp.lt.s32.totalorder %s17, 3
      %p163 = pnand %p161, %p162
      %p164 = pneg %p163
      // Predicated region
      $region9: #{tpu_custom_call.1} parent=5 // pred_check
        _
      $region10: #{tpu_custom_call.1} parent=5 // pred_check_branch
        %166 = sbr.rel (%p163) target = $region12
      $region11: #{tpu_custom_call.1} parent=5 // pred_region
        %s167 = ssub.s32 %s17, 1
        // Predicated region
        $region13: #{tpu_custom_call.1} parent=11 // pred_check
          %p168 = pneg %p64
        $region14: #{tpu_custom_call.1} parent=11 // pred_check_branch
          %170 = sbr.rel (%p168) target = $region16
        $region15: #{tpu_custom_call.1} parent=11 // pred_region
          %172 = vsyncadd [#allocation6], 0
          %s173 = sshll.u32 %s1, 4
          %s174 = int_to_ptr.hbm [resolvable:$true] %s173
          %s175 = sshll.u32 [#allocation5], 4
          %s176 = int_to_ptr.vmem [resolvable:$true] %s175
          %181 = dma.hbm_to_vmem [thread:$0]  %s174, 8192, %s176, [#allocation6], 256, 256, 16
        $region16: #{tpu_custom_call.1} parent=11 // pred_fallthru
          _
        // Predicated region
        $region17: #{tpu_custom_call.1} parent=11 // pred_check
          %p182 = pneg %p85
        $region18: #{tpu_custom_call.1} parent=11 // pred_check_branch
          %184 = sbr.rel (%p182) target = $region20
        $region19: #{tpu_custom_call.1} parent=11 // pred_region
          _
        $region20: #{tpu_custom_call.1} parent=11 // pred_fallthru
          _
        // Predicated region
        $region21: #{tpu_custom_call.1} parent=11 // pred_check
          %p185 = pneg %p106
        $region22: #{tpu_custom_call.1} parent=11 // pred_check_branch
          %187 = sbr.rel (%p185) target = $region24
        $region23: #{tpu_custom_call.1} parent=11 // pred_region
          _
        $region24: #{tpu_custom_call.1} parent=11 // pred_fallthru
          _
        // Predicated region
        $region25: #{tpu_custom_call.1} parent=11 // pred_check
          %p188 = pneg %p127
        $region26: #{tpu_custom_call.1} parent=11 // pred_check_branch
          %190 = sbr.rel (%p188) target = $region28
        $region27: #{tpu_custom_call.1} parent=11 // pred_region
          _
        $region28: #{tpu_custom_call.1} parent=11 // pred_fallthru
          _
      $region12: #{tpu_custom_call.1} parent=5 // pred_fallthru
        _
      %p191 = scmp.lt.s32.totalorder %s17, 2
      // Predicated region
      $region29: #{tpu_custom_call.1} parent=5 // pred_check
        %p192 = pneg %p191
      $region30: #{tpu_custom_call.1} parent=5 // pred_check_branch
        %194 = sbr.rel (%p192) target = $region32
      $region31: #{tpu_custom_call.1} parent=5 // pred_region
        // Predicated region
        $region33: #{tpu_custom_call.1} parent=31 // pred_check
          %p195 = pneg %p37
        $region34: #{tpu_custom_call.1} parent=31 // pred_check_branch
          %197 = sbr.rel (%p195) target = $region36
        $region35: #{tpu_custom_call.1} parent=31 // pred_region
          %s198 = sand.u32 %s27, 1
          %s199 = scalar_lea.sflag [#allocation4], %s198
          %s200 = sand.u32 %s27, 1
          %s201 = smul.addr %s200, 512
          %s202 = scalar_lea.vmem [#allocation3], %s201
          %s203 = smul.u32 32, %s17
          %205 = vsyncadd %s199, 0
          %s206 = smul.addr %s203, 2
          %s207 = smul.addr %s206, 8
          %s208 = scalar_lea.hbm %s0, %s207
          %s209 = sshll.u32 %s208, 4
          %s210 = int_to_ptr.hbm [resolvable:$true] %s209
          %s211 = sshll.u32 %s202, 4
          %s212 = int_to_ptr.vmem [resolvable:$true] %s211
          %217 = dma.hbm_to_vmem [thread:$0]  %s210, 8192, %s212, %s199, 256, 256, 16
        $region36: #{tpu_custom_call.1} parent=31 // pred_fallthru
          _
      $region32: #{tpu_custom_call.1} parent=5 // pred_fallthru
        _
      %p218 = scmp.le.s32.totalorder 1, %s17
      %p219 = scmp.lt.s32.totalorder %s17, 3
      %p220 = pnand %p218, %p219
      %p221 = pneg %p220
      // Predicated region
      $region37: #{tpu_custom_call.1} parent=5 // pred_check
        _
      $region38: #{tpu_custom_call.1} parent=5 // pred_check_branch
        %223 = sbr.rel (%p220) target = $region40
      $region39: #{tpu_custom_call.1} parent=5 // pred_region
        %s224 = ssub.s32 %s17, 1
        %s225 = sand.u32 %s30, 1
        %s226 = scalar_lea.sflag [#allocation4], %s225
        %s227 = sand.u32 %s30, 1
        %s228 = smul.addr %s227, 512
        %s229 = scalar_lea.vmem [#allocation3], %s228
        // Predicated region
        $region41: #{tpu_custom_call.1} parent=39 // pred_check
          %p230 = pneg %p43
        $region42: #{tpu_custom_call.1} parent=39 // pred_check_branch
          %232 = sbr.rel (%p230) target = $region44
        $region43: #{tpu_custom_call.1} parent=39 // pred_region
          %234 = dma.done %s226, 8192
        $region44: #{tpu_custom_call.1} parent=39 // pred_fallthru
          _
        // Predicated region
        $region45: #{tpu_custom_call.1} parent=39 // pred_check
          %p235 = pneg %p64
        $region46: #{tpu_custom_call.1} parent=39 // pred_check_branch
          %237 = sbr.rel (%p235) target = $region48
        $region47: #{tpu_custom_call.1} parent=39 // pred_region
          %239 = dma.done [#allocation6], 8192
        $region48: #{tpu_custom_call.1} parent=39 // pred_fallthru
          _
        %s240 = sand.u32 %s30, 1
        %s241 = scalar_lea.sflag [#allocation4], %s240
        %s242 = sand.u32 %s30, 1
        %s243 = smul.addr %s242, 512
        %s244 = scalar_lea.vmem [#allocation3], %s243
        %p245 = pneg %p43
        %p246 = pneg %p40
        %p247 = pneg %p64
        %p248 = pneg %p61
        %p249 = pneg %p85
        %p250 = pneg %p82
        %p251 = pneg %p106
        %p252 = pneg %p103
        %p253 = pneg %p127
        %p254 = pneg %p124
        %p255 = pneg %p153
        %p256 = pneg %p150
        %s257 = smul.u32 32, %s22
        %p258 = scmp.lt.s32.totalorder %s257, 63
        %s259 = scalar_select %p258, %s257, 63
        %s260 = smul.addr %s259, 8
        %s261 = scalar_lea.vmem %s5, %s260
        %s262 = smul.u32 32, %s22
        %s263 = smul.u32 32, %s22
        %p264 = scmp.lt.s32.totalorder %s263, 63
        %s265 = scalar_select %p264, %s263, 63
        %s266 = smul.addr %s265, 8
        %s267 = scalar_lea.vmem %s5, %s266
        %s268 = smul.u32 32, %s22
        %v269 = vld [vmem:[%s229] sm:$0xff]
        %v270 = vld [vmem:[%s229 + $0x8] sm:$0xff]
        %v271 = vld [vmem:[%s229 + $0x10] sm:$0xff]
        %v272 = vld [vmem:[%s229 + $0x18] sm:$0xff]
        %v273 = vld [vmem:[%s229 + $0x20] sm:$0xff]
        %v274 = vld [vmem:[%s229 + $0x28] sm:$0xff]
        %v275 = vld [vmem:[%s229 + $0x30] sm:$0xff]
        %v276 = vld [vmem:[%s229 + $0x38] sm:$0xff]
        %v277 = vld [vmem:[%s229 + $0x40] sm:$0xff]
        %v278 = vld [vmem:[%s229 + $0x48] sm:$0xff]
        %v279 = vld [vmem:[%s229 + $0x50] sm:$0xff]
        %v280 = vld [vmem:[%s229 + $0x58] sm:$0xff]
        %v281 = vld [vmem:[%s229 + $0x60] sm:$0xff]
        %v282 = vld [vmem:[%s229 + $0x68] sm:$0xff]
        %v283 = vld [vmem:[%s229 + $0x70] sm:$0xff]
        %v284 = vld [vmem:[%s229 + $0x78] sm:$0xff]
        %v285 = vld [vmem:[%s229 + $0x80] sm:$0xff]
        %v286 = vld [vmem:[%s229 + $0x88] sm:$0xff]
        %v287 = vld [vmem:[%s229 + $0x90] sm:$0xff]
        %v288 = vld [vmem:[%s229 + $0x98] sm:$0xff]
        %v289 = vld [vmem:[%s229 + $0xa0] sm:$0xff]
        %v290 = vld [vmem:[%s229 + $0xa8] sm:$0xff]
        %v291 = vld [vmem:[%s229 + $0xb0] sm:$0xff]
        %v292 = vld [vmem:[%s229 + $0xb8] sm:$0xff]
        %v293 = vld [vmem:[%s229 + $0xc0] sm:$0xff]
        %v294 = vld [vmem:[%s229 + $0xc8] sm:$0xff]
        %v295 = vld [vmem:[%s229 + $0xd0] sm:$0xff]
        %v296 = vld [vmem:[%s229 + $0xd8] sm:$0xff]
        %v297 = vld [vmem:[%s229 + $0xe0] sm:$0xff]
        %v298 = vld [vmem:[%s229 + $0xe8] sm:$0xff]
        %v299 = vld [vmem:[%s229 + $0xf0] sm:$0xff]
        %v300 = vld [vmem:[%s229 + $0xf8] sm:$0xff]
        %v301 = vld [vmem:[%s229 + $0x100] sm:$0xff]
        %v302 = vld [vmem:[%s229 + $0x108] sm:$0xff]
        %v303 = vld [vmem:[%s229 + $0x110] sm:$0xff]
        %v304 = vld [vmem:[%s229 + $0x118] sm:$0xff]
        %v305 = vld [vmem:[%s229 + $0x120] sm:$0xff]
        %v306 = vld [vmem:[%s229 + $0x128] sm:$0xff]
        %v307 = vld [vmem:[%s229 + $0x130] sm:$0xff]
        %v308 = vld [vmem:[%s229 + $0x138] sm:$0xff]
        %v309 = vld [vmem:[%s229 + $0x140] sm:$0xff]
        %v310 = vld [vmem:[%s229 + $0x148] sm:$0xff]
        %v311 = vld [vmem:[%s229 + $0x150] sm:$0xff]
        %v312 = vld [vmem:[%s229 + $0x158] sm:$0xff]
        %v313 = vld [vmem:[%s229 + $0x160] sm:$0xff]
        %v314 = vld [vmem:[%s229 + $0x168] sm:$0xff]
        %v315 = vld [vmem:[%s229 + $0x170] sm:$0xff]
        %v316 = vld [vmem:[%s229 + $0x178] sm:$0xff]
        %v317 = vld [vmem:[%s229 + $0x180] sm:$0xff]
        %v318 = vld [vmem:[%s229 + $0x188] sm:$0xff]
        %v319 = vld [vmem:[%s229 + $0x190] sm:$0xff]
        %v320 = vld [vmem:[%s229 + $0x198] sm:$0xff]
        %v321 = vld [vmem:[%s229 + $0x1a0] sm:$0xff]
        %v322 = vld [vmem:[%s229 + $0x1a8] sm:$0xff]
        %v323 = vld [vmem:[%s229 + $0x1b0] sm:$0xff]
        %v324 = vld [vmem:[%s229 + $0x1b8] sm:$0xff]
        %v325 = vld [vmem:[%s229 + $0x1c0] sm:$0xff]
        %v326 = vld [vmem:[%s229 + $0x1c8] sm:$0xff]
        %v327 = vld [vmem:[%s229 + $0x1d0] sm:$0xff]
        %v328 = vld [vmem:[%s229 + $0x1d8] sm:$0xff]
        %v329 = vld [vmem:[%s229 + $0x1e0] sm:$0xff]
        %v330 = vld [vmem:[%s229 + $0x1e8] sm:$0xff]
        %v331 = vld [vmem:[%s229 + $0x1f0] sm:$0xff]
        %v332 = vld [vmem:[%s229 + $0x1f8] sm:$0xff]
        %v333 = vld [vmem:[#allocation5] sm:$0xff]
        %v334 = vld [vmem:[#allocation5 + $0x8] sm:$0xff]
        %v335 = vld [vmem:[#allocation5 + $0x10] sm:$0xff]
        %v336 = vld [vmem:[#allocation5 + $0x18] sm:$0xff]
        %v337 = vld [vmem:[#allocation5 + $0x20] sm:$0xff]
        %v338 = vld [vmem:[#allocation5 + $0x28] sm:$0xff]
        %v339 = vld [vmem:[#allocation5 + $0x30] sm:$0xff]
        %v340 = vld [vmem:[#allocation5 + $0x38] sm:$0xff]
        %v341 = vld [vmem:[#allocation5 + $0x40] sm:$0xff]
        %v342 = vld [vmem:[#allocation5 + $0x48] sm:$0xff]
        %v343 = vld [vmem:[#allocation5 + $0x50] sm:$0xff]
        %v344 = vld [vmem:[#allocation5 + $0x58] sm:$0xff]
        %v345 = vld [vmem:[#allocation5 + $0x60] sm:$0xff]
        %v346 = vld [vmem:[#allocation5 + $0x68] sm:$0xff]
        %v347 = vld [vmem:[#allocation5 + $0x70] sm:$0xff]
        %v348 = vld [vmem:[#allocation5 + $0x78] sm:$0xff]
        %v349 = vld [vmem:[#allocation5 + $0x80] sm:$0xff]
        %v350 = vld [vmem:[#allocation5 + $0x88] sm:$0xff]
        %v351 = vld [vmem:[#allocation5 + $0x90] sm:$0xff]
        %v352 = vld [vmem:[#allocation5 + $0x98] sm:$0xff]
        %v353 = vld [vmem:[#allocation5 + $0xa0] sm:$0xff]
        %v354 = vld [vmem:[#allocation5 + $0xa8] sm:$0xff]
        %v355 = vld [vmem:[#allocation5 + $0xb0] sm:$0xff]
        %v356 = vld [vmem:[#allocation5 + $0xb8] sm:$0xff]
        %v357 = vld [vmem:[#allocation5 + $0xc0] sm:$0xff]
        %v358 = vld [vmem:[#allocation5 + $0xc8] sm:$0xff]
        %v359 = vld [vmem:[#allocation5 + $0xd0] sm:$0xff]
        %v360 = vld [vmem:[#allocation5 + $0xd8] sm:$0xff]
        %v361 = vld [vmem:[#allocation5 + $0xe0] sm:$0xff]
        %v362 = vld [vmem:[#allocation5 + $0xe8] sm:$0xff]
        %v363 = vld [vmem:[#allocation5 + $0xf0] sm:$0xff]
        %v364 = vld [vmem:[#allocation5 + $0xf8] sm:$0xff]
        %v365 = vld [vmem:[#allocation5 + $0x100] sm:$0xff]
        %v366 = vld [vmem:[#allocation5 + $0x108] sm:$0xff]
        %v367 = vld [vmem:[#allocation5 + $0x110] sm:$0xff]
        %v368 = vld [vmem:[#allocation5 + $0x118] sm:$0xff]
        %v369 = vld [vmem:[#allocation5 + $0x120] sm:$0xff]
        %v370 = vld [vmem:[#allocation5 + $0x128] sm:$0xff]
        %v371 = vld [vmem:[#allocation5 + $0x130] sm:$0xff]
        %v372 = vld [vmem:[#allocation5 + $0x138] sm:$0xff]
        %v373 = vld [vmem:[#allocation5 + $0x140] sm:$0xff]
        %v374 = vld [vmem:[#allocation5 + $0x148] sm:$0xff]
        %v375 = vld [vmem:[#allocation5 + $0x150] sm:$0xff]
        %v376 = vld [vmem:[#allocation5 + $0x158] sm:$0xff]
        %v377 = vld [vmem:[#allocation5 + $0x160] sm:$0xff]
        %v378 = vld [vmem:[#allocation5 + $0x168] sm:$0xff]
        %v379 = vld [vmem:[#allocation5 + $0x170] sm:$0xff]
        %v380 = vld [vmem:[#allocation5 + $0x178] sm:$0xff]
        %v381 = vld [vmem:[#allocation5 + $0x180] sm:$0xff]
        %v382 = vld [vmem:[#allocation5 + $0x188] sm:$0xff]
        %v383 = vld [vmem:[#allocation5 + $0x190] sm:$0xff]
        %v384 = vld [vmem:[#allocation5 + $0x198] sm:$0xff]
        %v385 = vld [vmem:[#allocation5 + $0x1a0] sm:$0xff]
        %v386 = vld [vmem:[#allocation5 + $0x1a8] sm:$0xff]
        %v387 = vld [vmem:[#allocation5 + $0x1b0] sm:$0xff]
        %v388 = vld [vmem:[#allocation5 + $0x1b8] sm:$0xff]
        %v389 = vld [vmem:[#allocation5 + $0x1c0] sm:$0xff]
        %v390 = vld [vmem:[#allocation5 + $0x1c8] sm:$0xff]
        %v391 = vld [vmem:[#allocation5 + $0x1d0] sm:$0xff]
        %v392 = vld [vmem:[#allocation5 + $0x1d8] sm:$0xff]
        %v393 = vld [vmem:[#allocation5 + $0x1e0] sm:$0xff]
        %v394 = vld [vmem:[#allocation5 + $0x1e8] sm:$0xff]
        %v395 = vld [vmem:[#allocation5 + $0x1f0] sm:$0xff]
        %v396 = vld [vmem:[#allocation5 + $0x1f8] sm:$0xff]
        %v397 = vld [vmem:[%s2] sm:$0x3]
        %v399 = vperm.slane %v397, 0
        %v400 = vperm.slane %v397, 1
        %403 = vmatpush.msra.mxu0 %v363
        %404 = vmatpush.msra.mxu0 %v361
        %405 = vmatpush.msra.mxu0 %v359
        %406 = vmatpush.msra.mxu0 %v357
        %407 = vmatpush.msra.mxu0 %v355
        %408 = vmatpush.msra.mxu0 %v353
        %409 = vmatpush.msra.mxu0 %v351
        %410 = vmatpush.msra.mxu0 %v349
        %411 = vmatpush.msra.mxu0 %v347
        %412 = vmatpush.msra.mxu0 %v345
        %413 = vmatpush.msra.mxu0 %v343
        %414 = vmatpush.msra.mxu0 %v341
        %415 = vmatpush.msra.mxu0 %v339
        %416 = vmatpush.msra.mxu0 %v337
        %417 = vmatpush.msra.mxu0 %v335
        %418 = vmatpush.msra.mxu0 %v333
        %419 = vmatmul.f32.gmra.mxu0 %v269
        %v420 = vpop.f32.mrf.mxu0
        %v421 = vadd.f32 %v399, %v420
        %422 = vmatmul.f32.gmra.mxu0 %v271
        %v423 = vpop.f32.mrf.mxu0
        %v424 = vadd.f32 %v399, %v423
        %425 = vmatmul.f32.gmra.mxu0 %v273
        %v426 = vpop.f32.mrf.mxu0
        %v427 = vadd.f32 %v399, %v426
        %428 = vmatmul.f32.gmra.mxu0 %v275
        %v429 = vpop.f32.mrf.mxu0
        %v430 = vadd.f32 %v399, %v429
        %431 = vmatmul.f32.gmra.mxu0 %v277
        %v432 = vpop.f32.mrf.mxu0
        %v433 = vadd.f32 %v399, %v432
        %434 = vmatmul.f32.gmra.mxu0 %v279
        %v435 = vpop.f32.mrf.mxu0
        %v436 = vadd.f32 %v399, %v435
        %437 = vmatmul.f32.gmra.mxu0 %v281
        %v438 = vpop.f32.mrf.mxu0
        %v439 = vadd.f32 %v399, %v438
        %440 = vmatmul.f32.gmra.mxu0 %v283
        %v441 = vpop.f32.mrf.mxu0
        %v442 = vadd.f32 %v399, %v441
        %443 = vmatmul.f32.gmra.mxu0 %v285
        %v444 = vpop.f32.mrf.mxu0
        %v445 = vadd.f32 %v399, %v444
        %446 = vmatmul.f32.gmra.mxu0 %v287
        %v447 = vpop.f32.mrf.mxu0
        %v448 = vadd.f32 %v399, %v447
        %449 = vmatmul.f32.gmra.mxu0 %v289
        %v450 = vpop.f32.mrf.mxu0
        %v451 = vadd.f32 %v399, %v450
        %452 = vmatmul.f32.gmra.mxu0 %v291
        %v453 = vpop.f32.mrf.mxu0
        %v454 = vadd.f32 %v399, %v453
        %455 = vmatmul.f32.gmra.mxu0 %v293
        %v456 = vpop.f32.mrf.mxu0
        %v457 = vadd.f32 %v399, %v456
        %458 = vmatmul.f32.gmra.mxu0 %v295
        %v459 = vpop.f32.mrf.mxu0
        %v460 = vadd.f32 %v399, %v459
        %461 = vmatmul.f32.gmra.mxu0 %v297
        %v462 = vpop.f32.mrf.mxu0
        %v463 = vadd.f32 %v399, %v462
        %464 = vmatmul.f32.gmra.mxu0 %v299
        %v465 = vpop.f32.mrf.mxu0
        %v466 = vadd.f32 %v399, %v465
        %467 = vmatmul.f32.gmra.mxu0 %v301
        %v468 = vpop.f32.mrf.mxu0
        %v469 = vadd.f32 %v399, %v468
        %470 = vmatmul.f32.gmra.mxu0 %v303
        %v471 = vpop.f32.mrf.mxu0
        %v472 = vadd.f32 %v399, %v471
        %473 = vmatmul.f32.gmra.mxu0 %v305
        %v474 = vpop.f32.mrf.mxu0
        %v475 = vadd.f32 %v399, %v474
        %476 = vmatmul.f32.gmra.mxu0 %v307
        %v477 = vpop.f32.mrf.mxu0
        %v478 = vadd.f32 %v399, %v477
        %479 = vmatmul.f32.gmra.mxu0 %v309
        %v480 = vpop.f32.mrf.mxu0
        %v481 = vadd.f32 %v399, %v480
        %482 = vmatmul.f32.gmra.mxu0 %v311
        %v483 = vpop.f32.mrf.mxu0
        %v484 = vadd.f32 %v399, %v483
        %485 = vmatmul.f32.gmra.mxu0 %v313
        %v486 = vpop.f32.mrf.mxu0
        %v487 = vadd.f32 %v399, %v486
        %488 = vmatmul.f32.gmra.mxu0 %v315
        %v489 = vpop.f32.mrf.mxu0
        %v490 = vadd.f32 %v399, %v489
        %491 = vmatmul.f32.gmra.mxu0 %v317
        %v492 = vpop.f32.mrf.mxu0
        %v493 = vadd.f32 %v399, %v492
        %494 = vmatmul.f32.gmra.mxu0 %v319
        %v495 = vpop.f32.mrf.mxu0
        %v496 = vadd.f32 %v399, %v495
        %497 = vmatmul.f32.gmra.mxu0 %v321
        %v498 = vpop.f32.mrf.mxu0
        %v499 = vadd.f32 %v399, %v498
        %500 = vmatmul.f32.gmra.mxu0 %v323
        %v501 = vpop.f32.mrf.mxu0
        %v502 = vadd.f32 %v399, %v501
        %503 = vmatmul.f32.gmra.mxu0 %v325
        %v504 = vpop.f32.mrf.mxu0
        %v505 = vadd.f32 %v399, %v504
        %506 = vmatmul.f32.gmra.mxu0 %v327
        %v507 = vpop.f32.mrf.mxu0
        %v508 = vadd.f32 %v399, %v507
        %509 = vmatmul.f32.gmra.mxu0 %v329
        %v510 = vpop.f32.mrf.mxu0
        %v511 = vadd.f32 %v399, %v510
        %512 = vmatmul.f32.gmra.mxu0 %v331
        %v513 = vpop.f32.mrf.mxu0
        %v514 = vadd.f32 %v399, %v513
        %515 = vdwg.mxu0
        %516 = vmatpush.msra.mxu0 %v395
        %517 = vmatpush.msra.mxu0 %v393
        %518 = vmatpush.msra.mxu0 %v391
        %519 = vmatpush.msra.mxu0 %v389
        %520 = vmatpush.msra.mxu0 %v387
        %521 = vmatpush.msra.mxu0 %v385
        %522 = vmatpush.msra.mxu0 %v383
        %523 = vmatpush.msra.mxu0 %v381
        %524 = vmatpush.msra.mxu0 %v379
        %525 = vmatpush.msra.mxu0 %v377
        %526 = vmatpush.msra.mxu0 %v375
        %527 = vmatpush.msra.mxu0 %v373
        %528 = vmatpush.msra.mxu0 %v371
        %529 = vmatpush.msra.mxu0 %v369
        %530 = vmatpush.msra.mxu0 %v367
        %531 = vmatpush.msra.mxu0 %v365
        %532 = vmatmul.f32.gmra.mxu0 %v270
        %v533 = vpop.f32.mrf.mxu0
        %v534 = vadd.f32 %v421, %v533
        %535 = vmatmul.f32.gmra.mxu0 %v272
        %v536 = vpop.f32.mrf.mxu0
        %v537 = vadd.f32 %v424, %v536
        %538 = vmatmul.f32.gmra.mxu0 %v274
        %v539 = vpop.f32.mrf.mxu0
        %v540 = vadd.f32 %v427, %v539
        %541 = vmatmul.f32.gmra.mxu0 %v276
        %v542 = vpop.f32.mrf.mxu0
        %v543 = vadd.f32 %v430, %v542
        %544 = vmatmul.f32.gmra.mxu0 %v278
        %v545 = vpop.f32.mrf.mxu0
        %v546 = vadd.f32 %v433, %v545
        %547 = vmatmul.f32.gmra.mxu0 %v280
        %v548 = vpop.f32.mrf.mxu0
        %v549 = vadd.f32 %v436, %v548
        %550 = vmatmul.f32.gmra.mxu0 %v282
        %v551 = vpop.f32.mrf.mxu0
        %v552 = vadd.f32 %v439, %v551
        %553 = vmatmul.f32.gmra.mxu0 %v284
        %v554 = vpop.f32.mrf.mxu0
        %v555 = vadd.f32 %v442, %v554
        %556 = vmatmul.f32.gmra.mxu0 %v286
        %v557 = vpop.f32.mrf.mxu0
        %v558 = vadd.f32 %v445, %v557
        %559 = vmatmul.f32.gmra.mxu0 %v288
        %v560 = vpop.f32.mrf.mxu0
        %v561 = vadd.f32 %v448, %v560
        %562 = vmatmul.f32.gmra.mxu0 %v290
        %v563 = vpop.f32.mrf.mxu0
        %v564 = vadd.f32 %v451, %v563
        %565 = vmatmul.f32.gmra.mxu0 %v292
        %v566 = vpop.f32.mrf.mxu0
        %v567 = vadd.f32 %v454, %v566
        %568 = vmatmul.f32.gmra.mxu0 %v294
        %v569 = vpop.f32.mrf.mxu0
        %v570 = vadd.f32 %v457, %v569
        %571 = vmatmul.f32.gmra.mxu0 %v296
        %v572 = vpop.f32.mrf.mxu0
        %v573 = vadd.f32 %v460, %v572
        %574 = vmatmul.f32.gmra.mxu0 %v298
        %v575 = vpop.f32.mrf.mxu0
        %v576 = vadd.f32 %v463, %v575
        %577 = vmatmul.f32.gmra.mxu0 %v300
        %v578 = vpop.f32.mrf.mxu0
        %v579 = vadd.f32 %v466, %v578
        %580 = vmatmul.f32.gmra.mxu0 %v302
        %v581 = vpop.f32.mrf.mxu0
        %v582 = vadd.f32 %v469, %v581
        %583 = vmatmul.f32.gmra.mxu0 %v304
        %v584 = vpop.f32.mrf.mxu0
        %v585 = vadd.f32 %v472, %v584
        %586 = vmatmul.f32.gmra.mxu0 %v306
        %v587 = vpop.f32.mrf.mxu0
        %v588 = vadd.f32 %v475, %v587
        %589 = vmatmul.f32.gmra.mxu0 %v308
        %v590 = vpop.f32.mrf.mxu0
        %v591 = vadd.f32 %v478, %v590
        %592 = vmatmul.f32.gmra.mxu0 %v310
        %v593 = vpop.f32.mrf.mxu0
        %v594 = vadd.f32 %v481, %v593
        %595 = vmatmul.f32.gmra.mxu0 %v312
        %v596 = vpop.f32.mrf.mxu0
        %v597 = vadd.f32 %v484, %v596
        %598 = vmatmul.f32.gmra.mxu0 %v314
        %v599 = vpop.f32.mrf.mxu0
        %v600 = vadd.f32 %v487, %v599
        %601 = vmatmul.f32.gmra.mxu0 %v316
        %v602 = vpop.f32.mrf.mxu0
        %v603 = vadd.f32 %v490, %v602
        %604 = vmatmul.f32.gmra.mxu0 %v318
        %v605 = vpop.f32.mrf.mxu0
        %v606 = vadd.f32 %v493, %v605
        %607 = vmatmul.f32.gmra.mxu0 %v320
        %v608 = vpop.f32.mrf.mxu0
        %v609 = vadd.f32 %v496, %v608
        %610 = vmatmul.f32.gmra.mxu0 %v322
        %v611 = vpop.f32.mrf.mxu0
        %v612 = vadd.f32 %v499, %v611
        %613 = vmatmul.f32.gmra.mxu0 %v324
        %v614 = vpop.f32.mrf.mxu0
        %v615 = vadd.f32 %v502, %v614
        %616 = vmatmul.f32.gmra.mxu0 %v326
        %v617 = vpop.f32.mrf.mxu0
        %v618 = vadd.f32 %v505, %v617
        %619 = vmatmul.f32.gmra.mxu0 %v328
        %v620 = vpop.f32.mrf.mxu0
        %v621 = vadd.f32 %v508, %v620
        %622 = vmatmul.f32.gmra.mxu0 %v330
        %v623 = vpop.f32.mrf.mxu0
        %v624 = vadd.f32 %v511, %v623
        %625 = vmatmul.f32.gmra.mxu0 %v332
        %v626 = vpop.f32.mrf.mxu0
        %v627 = vadd.f32 %v514, %v626
        %628 = vdwg.mxu0
        %629 = vmatpush.msra.mxu0 %v364
        %630 = vmatpush.msra.mxu0 %v362
        %631 = vmatpush.msra.mxu0 %v360
        %632 = vmatpush.msra.mxu0 %v358
        %633 = vmatpush.msra.mxu0 %v356
        %634 = vmatpush.msra.mxu0 %v354
        %635 = vmatpush.msra.mxu0 %v352
        %636 = vmatpush.msra.mxu0 %v350
        %637 = vmatpush.msra.mxu0 %v348
        %638 = vmatpush.msra.mxu0 %v346
        %639 = vmatpush.msra.mxu0 %v344
        %640 = vmatpush.msra.mxu0 %v342
        %641 = vmatpush.msra.mxu0 %v340
        %642 = vmatpush.msra.mxu0 %v338
        %643 = vmatpush.msra.mxu0 %v336
        %644 = vmatpush.msra.mxu0 %v334
        %645 = vmatmul.f32.gmra.mxu0 %v269
        %v646 = vpop.f32.mrf.mxu0
        %v647 = vadd.f32 %v400, %v646
        %648 = vmatmul.f32.gmra.mxu0 %v271
        %v649 = vpop.f32.mrf.mxu0
        %v650 = vadd.f32 %v400, %v649
        %651 = vmatmul.f32.gmra.mxu0 %v273
        %v652 = vpop.f32.mrf.mxu0
        %v653 = vadd.f32 %v400, %v652
        %654 = vmatmul.f32.gmra.mxu0 %v275
        %v655 = vpop.f32.mrf.mxu0
        %v656 = vadd.f32 %v400, %v655
        %657 = vmatmul.f32.gmra.mxu0 %v277
        %v658 = vpop.f32.mrf.mxu0
        %v659 = vadd.f32 %v400, %v658
        %660 = vmatmul.f32.gmra.mxu0 %v279
        %v661 = vpop.f32.mrf.mxu0
        %v662 = vadd.f32 %v400, %v661
        %663 = vmatmul.f32.gmra.mxu0 %v281
        %v664 = vpop.f32.mrf.mxu0
        %v665 = vadd.f32 %v400, %v664
        %666 = vmatmul.f32.gmra.mxu0 %v283
        %v667 = vpop.f32.mrf.mxu0
        %v668 = vadd.f32 %v400, %v667
        %669 = vmatmul.f32.gmra.mxu0 %v285
        %v670 = vpop.f32.mrf.mxu0
        %v671 = vadd.f32 %v400, %v670
        %672 = vmatmul.f32.gmra.mxu0 %v287
        %v673 = vpop.f32.mrf.mxu0
        %v674 = vadd.f32 %v400, %v673
        %675 = vmatmul.f32.gmra.mxu0 %v289
        %v676 = vpop.f32.mrf.mxu0
        %v677 = vadd.f32 %v400, %v676
        %678 = vmatmul.f32.gmra.mxu0 %v291
        %v679 = vpop.f32.mrf.mxu0
        %v680 = vadd.f32 %v400, %v679
        %681 = vmatmul.f32.gmra.mxu0 %v293
        %v682 = vpop.f32.mrf.mxu0
        %v683 = vadd.f32 %v400, %v682
        %684 = vmatmul.f32.gmra.mxu0 %v295
        %v685 = vpop.f32.mrf.mxu0
        %v686 = vadd.f32 %v400, %v685
        %687 = vmatmul.f32.gmra.mxu0 %v297
        %v688 = vpop.f32.mrf.mxu0
        %v689 = vadd.f32 %v400, %v688
        %690 = vmatmul.f32.gmra.mxu0 %v299
        %v691 = vpop.f32.mrf.mxu0
        %v692 = vadd.f32 %v400, %v691
        %693 = vmatmul.f32.gmra.mxu0 %v301
        %v694 = vpop.f32.mrf.mxu0
        %v695 = vadd.f32 %v400, %v694
        %696 = vmatmul.f32.gmra.mxu0 %v303
        %v697 = vpop.f32.mrf.mxu0
        %v698 = vadd.f32 %v400, %v697
        %699 = vmatmul.f32.gmra.mxu0 %v305
        %v700 = vpop.f32.mrf.mxu0
        %v701 = vadd.f32 %v400, %v700
        %702 = vmatmul.f32.gmra.mxu0 %v307
        %v703 = vpop.f32.mrf.mxu0
        %v704 = vadd.f32 %v400, %v703
        %705 = vmatmul.f32.gmra.mxu0 %v309
        %v706 = vpop.f32.mrf.mxu0
        %v707 = vadd.f32 %v400, %v706
        %708 = vmatmul.f32.gmra.mxu0 %v311
        %v709 = vpop.f32.mrf.mxu0
        %v710 = vadd.f32 %v400, %v709
        %711 = vmatmul.f32.gmra.mxu0 %v313
        %v712 = vpop.f32.mrf.mxu0
        %v713 = vadd.f32 %v400, %v712
        %714 = vmatmul.f32.gmra.mxu0 %v315
        %v715 = vpop.f32.mrf.mxu0
        %v716 = vadd.f32 %v400, %v715
        %717 = vmatmul.f32.gmra.mxu0 %v317
        %v718 = vpop.f32.mrf.mxu0
        %v719 = vadd.f32 %v400, %v718
        %720 = vmatmul.f32.gmra.mxu0 %v319
        %v721 = vpop.f32.mrf.mxu0
        %v722 = vadd.f32 %v400, %v721
        %723 = vmatmul.f32.gmra.mxu0 %v321
        %v724 = vpop.f32.mrf.mxu0
        %v725 = vadd.f32 %v400, %v724
        %726 = vmatmul.f32.gmra.mxu0 %v323
        %v727 = vpop.f32.mrf.mxu0
        %v728 = vadd.f32 %v400, %v727
        %729 = vmatmul.f32.gmra.mxu0 %v325
        %v730 = vpop.f32.mrf.mxu0
        %v731 = vadd.f32 %v400, %v730
        %732 = vmatmul.f32.gmra.mxu0 %v327
        %v733 = vpop.f32.mrf.mxu0
        %v734 = vadd.f32 %v400, %v733
        %735 = vmatmul.f32.gmra.mxu0 %v329
        %v736 = vpop.f32.mrf.mxu0
        %v737 = vadd.f32 %v400, %v736
        %738 = vmatmul.f32.gmra.mxu0 %v331
        %v739 = vpop.f32.mrf.mxu0
        %v740 = vadd.f32 %v400, %v739
        %741 = vdwg.mxu0
        %742 = vmatpush.msra.mxu0 %v396
        %743 = vmatpush.msra.mxu0 %v394
        %744 = vmatpush.msra.mxu0 %v392
        %745 = vmatpush.msra.mxu0 %v390
        %746 = vmatpush.msra.mxu0 %v388
        %747 = vmatpush.msra.mxu0 %v386
        %748 = vmatpush.msra.mxu0 %v384
        %749 = vmatpush.msra.mxu0 %v382
        %750 = vmatpush.msra.mxu0 %v380
        %751 = vmatpush.msra.mxu0 %v378
        %752 = vmatpush.msra.mxu0 %v376
        %753 = vmatpush.msra.mxu0 %v374
        %754 = vmatpush.msra.mxu0 %v372
        %755 = vmatpush.msra.mxu0 %v370
        %756 = vmatpush.msra.mxu0 %v368
        %757 = vmatpush.msra.mxu0 %v366
        %758 = vmatmul.f32.gmra.mxu0 %v270
        %v759 = vpop.f32.mrf.mxu0
        %v760 = vadd.f32 %v647, %v759
        %761 = vmatmul.f32.gmra.mxu0 %v272
        %v762 = vpop.f32.mrf.mxu0
        %v763 = vadd.f32 %v650, %v762
        %764 = vmatmul.f32.gmra.mxu0 %v274
        %v765 = vpop.f32.mrf.mxu0
        %v766 = vadd.f32 %v653, %v765
        %767 = vmatmul.f32.gmra.mxu0 %v276
        %v768 = vpop.f32.mrf.mxu0
        %v769 = vadd.f32 %v656, %v768
        %770 = vmatmul.f32.gmra.mxu0 %v278
        %v771 = vpop.f32.mrf.mxu0
        %v772 = vadd.f32 %v659, %v771
        %773 = vmatmul.f32.gmra.mxu0 %v280
        %v774 = vpop.f32.mrf.mxu0
        %v775 = vadd.f32 %v662, %v774
        %776 = vmatmul.f32.gmra.mxu0 %v282
        %v777 = vpop.f32.mrf.mxu0
        %v778 = vadd.f32 %v665, %v777
        %779 = vmatmul.f32.gmra.mxu0 %v284
        %v780 = vpop.f32.mrf.mxu0
        %v781 = vadd.f32 %v668, %v780
        %782 = vmatmul.f32.gmra.mxu0 %v286
        %v783 = vpop.f32.mrf.mxu0
        %v784 = vadd.f32 %v671, %v783
        %785 = vmatmul.f32.gmra.mxu0 %v288
        %v786 = vpop.f32.mrf.mxu0
        %v787 = vadd.f32 %v674, %v786
        %788 = vmatmul.f32.gmra.mxu0 %v290
        %v789 = vpop.f32.mrf.mxu0
        %v790 = vadd.f32 %v677, %v789
        %791 = vmatmul.f32.gmra.mxu0 %v292
        %v792 = vpop.f32.mrf.mxu0
        %v793 = vadd.f32 %v680, %v792
        %794 = vmatmul.f32.gmra.mxu0 %v294
        %v795 = vpop.f32.mrf.mxu0
        %v796 = vadd.f32 %v683, %v795
        %797 = vmatmul.f32.gmra.mxu0 %v296
        %v798 = vpop.f32.mrf.mxu0
        %v799 = vadd.f32 %v686, %v798
        %800 = vmatmul.f32.gmra.mxu0 %v298
        %v801 = vpop.f32.mrf.mxu0
        %v802 = vadd.f32 %v689, %v801
        %803 = vmatmul.f32.gmra.mxu0 %v300
        %v804 = vpop.f32.mrf.mxu0
        %v805 = vadd.f32 %v692, %v804
        %806 = vmatmul.f32.gmra.mxu0 %v302
        %v807 = vpop.f32.mrf.mxu0
        %v808 = vadd.f32 %v695, %v807
        %809 = vmatmul.f32.gmra.mxu0 %v304
        %v810 = vpop.f32.mrf.mxu0
        %v811 = vadd.f32 %v698, %v810
        %812 = vmatmul.f32.gmra.mxu0 %v306
        %v813 = vpop.f32.mrf.mxu0
        %v814 = vadd.f32 %v701, %v813
        %815 = vmatmul.f32.gmra.mxu0 %v308
        %v816 = vpop.f32.mrf.mxu0
        %v817 = vadd.f32 %v704, %v816
        %818 = vmatmul.f32.gmra.mxu0 %v310
        %v819 = vpop.f32.mrf.mxu0
        %v820 = vadd.f32 %v707, %v819
        %821 = vmatmul.f32.gmra.mxu0 %v312
        %v822 = vpop.f32.mrf.mxu0
        %v823 = vadd.f32 %v710, %v822
        %824 = vmatmul.f32.gmra.mxu0 %v314
        %v825 = vpop.f32.mrf.mxu0
        %v826 = vadd.f32 %v713, %v825
        %827 = vmatmul.f32.gmra.mxu0 %v316
        %v828 = vpop.f32.mrf.mxu0
        %v829 = vadd.f32 %v716, %v828
        %830 = vmatmul.f32.gmra.mxu0 %v318
        %v831 = vpop.f32.mrf.mxu0
        %v832 = vadd.f32 %v719, %v831
        %833 = vmatmul.f32.gmra.mxu0 %v320
        %v834 = vpop.f32.mrf.mxu0
        %v835 = vadd.f32 %v722, %v834
        %836 = vmatmul.f32.gmra.mxu0 %v322
        %v837 = vpop.f32.mrf.mxu0
        %v838 = vadd.f32 %v725, %v837
        %839 = vmatmul.f32.gmra.mxu0 %v324
        %v840 = vpop.f32.mrf.mxu0
        %v841 = vadd.f32 %v728, %v840
        %842 = vmatmul.f32.gmra.mxu0 %v326
        %v843 = vpop.f32.mrf.mxu0
        %v844 = vadd.f32 %v731, %v843
        %845 = vmatmul.f32.gmra.mxu0 %v328
        %v846 = vpop.f32.mrf.mxu0
        %v847 = vadd.f32 %v734, %v846
        %848 = vmatmul.f32.gmra.mxu0 %v330
        %v849 = vpop.f32.mrf.mxu0
        %v850 = vadd.f32 %v737, %v849
        %851 = vmatmul.f32.gmra.mxu0 %v332
        %v852 = vpop.f32.mrf.mxu0
        %v853 = vadd.f32 %v740, %v852
        %854 = vdwg.mxu0
        %v855 = vtanh.pop %v534
        %v856 = vtanh.pop %v537
        %v857 = vtanh.pop %v540
        %v858 = vtanh.pop %v543
        %v859 = vtanh.pop %v546
        %v860 = vtanh.pop %v549
        %v861 = vtanh.pop %v552
        %v862 = vtanh.pop %v555
        %v863 = vtanh.pop %v558
        %v864 = vtanh.pop %v561
        %v865 = vtanh.pop %v564
        %v866 = vtanh.pop %v567
        %v867 = vtanh.pop %v570
        %v868 = vtanh.pop %v573
        %v869 = vtanh.pop %v576
        %v870 = vtanh.pop %v579
        %v871 = vtanh.pop %v582
        %v872 = vtanh.pop %v585
        %v873 = vtanh.pop %v588
        %v874 = vtanh.pop %v591
        %v875 = vtanh.pop %v594
        %v876 = vtanh.pop %v597
        %v877 = vtanh.pop %v600
        %v878 = vtanh.pop %v603
        %v879 = vtanh.pop %v606
        %v880 = vtanh.pop %v609
        %v881 = vtanh.pop %v612
        %v882 = vtanh.pop %v615
        %v883 = vtanh.pop %v618
        %v884 = vtanh.pop %v621
        %v885 = vtanh.pop %v624
        %v886 = vtanh.pop %v627
        %v887 = vxor.u32 %v760, 2147483648
        %v888 = vxor.u32 %v763, 2147483648
        %v889 = vxor.u32 %v766, 2147483648
        %v890 = vxor.u32 %v769, 2147483648
        %v891 = vxor.u32 %v772, 2147483648
        %v892 = vxor.u32 %v775, 2147483648
        %v893 = vxor.u32 %v778, 2147483648
        %v894 = vxor.u32 %v781, 2147483648
        %v895 = vxor.u32 %v784, 2147483648
        %v896 = vxor.u32 %v787, 2147483648
        %v897 = vxor.u32 %v790, 2147483648
        %v898 = vxor.u32 %v793, 2147483648
        %v899 = vxor.u32 %v796, 2147483648
        %v900 = vxor.u32 %v799, 2147483648
        %v901 = vxor.u32 %v802, 2147483648
        %v902 = vxor.u32 %v805, 2147483648
        %v903 = vxor.u32 %v808, 2147483648
        %v904 = vxor.u32 %v811, 2147483648
        %v905 = vxor.u32 %v814, 2147483648
        %v906 = vxor.u32 %v817, 2147483648
        %v907 = vxor.u32 %v820, 2147483648
        %v908 = vxor.u32 %v823, 2147483648
        %v909 = vxor.u32 %v826, 2147483648
        %v910 = vxor.u32 %v829, 2147483648
        %v911 = vxor.u32 %v832, 2147483648
        %v912 = vxor.u32 %v835, 2147483648
        %v913 = vxor.u32 %v838, 2147483648
        %v914 = vxor.u32 %v841, 2147483648
        %v915 = vxor.u32 %v844, 2147483648
        %v916 = vxor.u32 %v847, 2147483648
        %v917 = vxor.u32 %v850, 2147483648
        %v918 = vxor.u32 %v853, 2147483648
        %v919 = vmul.f32 %v887, 1.442695
        %v920 = vpow.pop %v919
        %v921 = vmul.f32 %v888, 1.442695
        %v922 = vpow.pop %v921
        %v923 = vmul.f32 %v889, 1.442695
        %v924 = vpow.pop %v923
        %v925 = vmul.f32 %v890, 1.442695
        %v926 = vpow.pop %v925
        %v927 = vmul.f32 %v891, 1.442695
        %v928 = vpow.pop %v927
        %v929 = vmul.f32 %v892, 1.442695
        %v930 = vpow.pop %v929
        %v931 = vmul.f32 %v893, 1.442695
        %v932 = vpow.pop %v931
        %v933 = vmul.f32 %v894, 1.442695
        %v934 = vpow.pop %v933
        %v935 = vmul.f32 %v895, 1.442695
        %v936 = vpow.pop %v935
        %v937 = vmul.f32 %v896, 1.442695
        %v938 = vpow.pop %v937
        %v939 = vmul.f32 %v897, 1.442695
        %v940 = vpow.pop %v939
        %v941 = vmul.f32 %v898, 1.442695
        %v942 = vpow.pop %v941
        %v943 = vmul.f32 %v899, 1.442695
        %v944 = vpow.pop %v943
        %v945 = vmul.f32 %v900, 1.442695
        %v946 = vpow.pop %v945
        %v947 = vmul.f32 %v901, 1.442695
        %v948 = vpow.pop %v947
        %v949 = vmul.f32 %v902, 1.442695
        %v950 = vpow.pop %v949
        %v951 = vmul.f32 %v903, 1.442695
        %v952 = vpow.pop %v951
        %v953 = vmul.f32 %v904, 1.442695
        %v954 = vpow.pop %v953
        %v955 = vmul.f32 %v905, 1.442695
        %v956 = vpow.pop %v955
        %v957 = vmul.f32 %v906, 1.442695
        %v958 = vpow.pop %v957
        %v959 = vmul.f32 %v907, 1.442695
        %v960 = vpow.pop %v959
        %v961 = vmul.f32 %v908, 1.442695
        %v962 = vpow.pop %v961
        %v963 = vmul.f32 %v909, 1.442695
        %v964 = vpow.pop %v963
        %v965 = vmul.f32 %v910, 1.442695
        %v966 = vpow.pop %v965
        %v967 = vmul.f32 %v911, 1.442695
        %v968 = vpow.pop %v967
        %v969 = vmul.f32 %v912, 1.442695
        %v970 = vpow.pop %v969
        %v971 = vmul.f32 %v913, 1.442695
        %v972 = vpow.pop %v971
        %v973 = vmul.f32 %v914, 1.442695
        %v974 = vpow.pop %v973
        %v975 = vmul.f32 %v915, 1.442695
        %v976 = vpow.pop %v975
        %v977 = vmul.f32 %v916, 1.442695
        %v978 = vpow.pop %v977
        %v979 = vmul.f32 %v917, 1.442695
        %v980 = vpow.pop %v979
        %v981 = vmul.f32 %v918, 1.442695
        %v982 = vpow.pop %v981
        %v983 = vadd.f32 %v920, 1.0
        %v984 = vadd.f32 %v922, 1.0
        %v985 = vadd.f32 %v924, 1.0
        %v986 = vadd.f32 %v926, 1.0
        %v987 = vadd.f32 %v928, 1.0
        %v988 = vadd.f32 %v930, 1.0
        %v989 = vadd.f32 %v932, 1.0
        %v990 = vadd.f32 %v934, 1.0
        %v991 = vadd.f32 %v936, 1.0
        %v992 = vadd.f32 %v938, 1.0
        %v993 = vadd.f32 %v940, 1.0
        %v994 = vadd.f32 %v942, 1.0
        %v995 = vadd.f32 %v944, 1.0
        %v996 = vadd.f32 %v946, 1.0
        %v997 = vadd.f32 %v948, 1.0
        %v998 = vadd.f32 %v950, 1.0
        %v999 = vadd.f32 %v952, 1.0
        %v1000 = vadd.f32 %v954, 1.0
        %v1001 = vadd.f32 %v956, 1.0
        %v1002 = vadd.f32 %v958, 1.0
        %v1003 = vadd.f32 %v960, 1.0
        %v1004 = vadd.f32 %v962, 1.0
        %v1005 = vadd.f32 %v964, 1.0
        %v1006 = vadd.f32 %v966, 1.0
        %v1007 = vadd.f32 %v968, 1.0
        %v1008 = vadd.f32 %v970, 1.0
        %v1009 = vadd.f32 %v972, 1.0
        %v1010 = vadd.f32 %v974, 1.0
        %v1011 = vadd.f32 %v976, 1.0
        %v1012 = vadd.f32 %v978, 1.0
        %v1013 = vadd.f32 %v980, 1.0
        %v1014 = vadd.f32 %v982, 1.0
        %v1015 = vrcp.pop %v983
        %v1016 = vmul.f32 %v983, %v1015
        %v1017 = vsub.f32 1.0, %v1016
        %v1018 = vmul.f32 %v1015, %v1017
        %v1019 = vadd.f32 %v1015, %v1018
        %vm1020 = vweird.f32 %v983
        %vm1021 = vweird.f32 %v1015
        %vm1022 = vmor %vm1020, %vm1021
        %v1023 = vsel %vm1022, %v1015, %v1019
        %v1024 = vand.u32 2147483647, %v983
        %vm1025 = vcmp.eq.f32.partialorder %v1024, 8.507059e+37
        %v1026 = vand.u32 %v983, 2147483648
        %v1027 = vor.u32 1.1754944e-38, %v1026
        %v1028 = vsel %vm1025, %v1027, %v1023
        %v1029 = vmul.f32 1.0, %v1028
        %v1030 = vrcp.pop %v984
        %v1031 = vmul.f32 %v984, %v1030
        %v1032 = vsub.f32 1.0, %v1031
        %v1033 = vmul.f32 %v1030, %v1032
        %v1034 = vadd.f32 %v1030, %v1033
        %vm1035 = vweird.f32 %v984
        %vm1036 = vweird.f32 %v1030
        %vm1037 = vmor %vm1035, %vm1036
        %v1038 = vsel %vm1037, %v1030, %v1034
        %v1039 = vand.u32 2147483647, %v984
        %vm1040 = vcmp.eq.f32.partialorder %v1039, 8.507059e+37
        %v1041 = vand.u32 %v984, 2147483648
        %v1042 = vor.u32 1.1754944e-38, %v1041
        %v1043 = vsel %vm1040, %v1042, %v1038
        %v1044 = vmul.f32 1.0, %v1043
        %v1045 = vrcp.pop %v985
        %v1046 = vmul.f32 %v985, %v1045
        %v1047 = vsub.f32 1.0, %v1046
        %v1048 = vmul.f32 %v1045, %v1047
        %v1049 = vadd.f32 %v1045, %v1048
        %vm1050 = vweird.f32 %v985
        %vm1051 = vweird.f32 %v1045
        %vm1052 = vmor %vm1050, %vm1051
        %v1053 = vsel %vm1052, %v1045, %v1049
        %v1054 = vand.u32 2147483647, %v985
        %vm1055 = vcmp.eq.f32.partialorder %v1054, 8.507059e+37
        %v1056 = vand.u32 %v985, 2147483648
        %v1057 = vor.u32 1.1754944e-38, %v1056
        %v1058 = vsel %vm1055, %v1057, %v1053
        %v1059 = vmul.f32 1.0, %v1058
        %v1060 = vrcp.pop %v986
        %v1061 = vmul.f32 %v986, %v1060
        %v1062 = vsub.f32 1.0, %v1061
        %v1063 = vmul.f32 %v1060, %v1062
        %v1064 = vadd.f32 %v1060, %v1063
        %vm1065 = vweird.f32 %v986
        %vm1066 = vweird.f32 %v1060
        %vm1067 = vmor %vm1065, %vm1066
        %v1068 = vsel %vm1067, %v1060, %v1064
        %v1069 = vand.u32 2147483647, %v986
        %vm1070 = vcmp.eq.f32.partialorder %v1069, 8.507059e+37
        %v1071 = vand.u32 %v986, 2147483648
        %v1072 = vor.u32 1.1754944e-38, %v1071
        %v1073 = vsel %vm1070, %v1072, %v1068
        %v1074 = vmul.f32 1.0, %v1073
        %v1075 = vrcp.pop %v987
        %v1076 = vmul.f32 %v987, %v1075
        %v1077 = vsub.f32 1.0, %v1076
        %v1078 = vmul.f32 %v1075, %v1077
        %v1079 = vadd.f32 %v1075, %v1078
        %vm1080 = vweird.f32 %v987
        %vm1081 = vweird.f32 %v1075
        %vm1082 = vmor %vm1080, %vm1081
        %v1083 = vsel %vm1082, %v1075, %v1079
        %v1084 = vand.u32 2147483647, %v987
        %vm1085 = vcmp.eq.f32.partialorder %v1084, 8.507059e+37
        %v1086 = vand.u32 %v987, 2147483648
        %v1087 = vor.u32 1.1754944e-38, %v1086
        %v1088 = vsel %vm1085, %v1087, %v1083
        %v1089 = vmul.f32 1.0, %v1088
        %v1090 = vrcp.pop %v988
        %v1091 = vmul.f32 %v988, %v1090
        %v1092 = vsub.f32 1.0, %v1091
        %v1093 = vmul.f32 %v1090, %v1092
        %v1094 = vadd.f32 %v1090, %v1093
        %vm1095 = vweird.f32 %v988
        %vm1096 = vweird.f32 %v1090
        %vm1097 = vmor %vm1095, %vm1096
        %v1098 = vsel %vm1097, %v1090, %v1094
        %v1099 = vand.u32 2147483647, %v988
        %vm1100 = vcmp.eq.f32.partialorder %v1099, 8.507059e+37
        %v1101 = vand.u32 %v988, 2147483648
        %v1102 = vor.u32 1.1754944e-38, %v1101
        %v1103 = vsel %vm1100, %v1102, %v1098
        %v1104 = vmul.f32 1.0, %v1103
        %v1105 = vrcp.pop %v989
        %v1106 = vmul.f32 %v989, %v1105
        %v1107 = vsub.f32 1.0, %v1106
        %v1108 = vmul.f32 %v1105, %v1107
        %v1109 = vadd.f32 %v1105, %v1108
        %vm1110 = vweird.f32 %v989
        %vm1111 = vweird.f32 %v1105
        %vm1112 = vmor %vm1110, %vm1111
        %v1113 = vsel %vm1112, %v1105, %v1109
        %v1114 = vand.u32 2147483647, %v989
        %vm1115 = vcmp.eq.f32.partialorder %v1114, 8.507059e+37
        %v1116 = vand.u32 %v989, 2147483648
        %v1117 = vor.u32 1.1754944e-38, %v1116
        %v1118 = vsel %vm1115, %v1117, %v1113
        %v1119 = vmul.f32 1.0, %v1118
        %v1120 = vrcp.pop %v990
        %v1121 = vmul.f32 %v990, %v1120
        %v1122 = vsub.f32 1.0, %v1121
        %v1123 = vmul.f32 %v1120, %v1122
        %v1124 = vadd.f32 %v1120, %v1123
        %vm1125 = vweird.f32 %v990
        %vm1126 = vweird.f32 %v1120
        %vm1127 = vmor %vm1125, %vm1126
        %v1128 = vsel %vm1127, %v1120, %v1124
        %v1129 = vand.u32 2147483647, %v990
        %vm1130 = vcmp.eq.f32.partialorder %v1129, 8.507059e+37
        %v1131 = vand.u32 %v990, 2147483648
        %v1132 = vor.u32 1.1754944e-38, %v1131
        %v1133 = vsel %vm1130, %v1132, %v1128
        %v1134 = vmul.f32 1.0, %v1133
        %v1135 = vrcp.pop %v991
        %v1136 = vmul.f32 %v991, %v1135
        %v1137 = vsub.f32 1.0, %v1136
        %v1138 = vmul.f32 %v1135, %v1137
        %v1139 = vadd.f32 %v1135, %v1138
        %vm1140 = vweird.f32 %v991
        %vm1141 = vweird.f32 %v1135
        %vm1142 = vmor %vm1140, %vm1141
        %v1143 = vsel %vm1142, %v1135, %v1139
        %v1144 = vand.u32 2147483647, %v991
        %vm1145 = vcmp.eq.f32.partialorder %v1144, 8.507059e+37
        %v1146 = vand.u32 %v991, 2147483648
        %v1147 = vor.u32 1.1754944e-38, %v1146
        %v1148 = vsel %vm1145, %v1147, %v1143
        %v1149 = vmul.f32 1.0, %v1148
        %v1150 = vrcp.pop %v992
        %v1151 = vmul.f32 %v992, %v1150
        %v1152 = vsub.f32 1.0, %v1151
        %v1153 = vmul.f32 %v1150, %v1152
        %v1154 = vadd.f32 %v1150, %v1153
        %vm1155 = vweird.f32 %v992
        %vm1156 = vweird.f32 %v1150
        %vm1157 = vmor %vm1155, %vm1156
        %v1158 = vsel %vm1157, %v1150, %v1154
        %v1159 = vand.u32 2147483647, %v992
        %vm1160 = vcmp.eq.f32.partialorder %v1159, 8.507059e+37
        %v1161 = vand.u32 %v992, 2147483648
        %v1162 = vor.u32 1.1754944e-38, %v1161
        %v1163 = vsel %vm1160, %v1162, %v1158
        %v1164 = vmul.f32 1.0, %v1163
        %v1165 = vrcp.pop %v993
        %v1166 = vmul.f32 %v993, %v1165
        %v1167 = vsub.f32 1.0, %v1166
        %v1168 = vmul.f32 %v1165, %v1167
        %v1169 = vadd.f32 %v1165, %v1168
        %vm1170 = vweird.f32 %v993
        %vm1171 = vweird.f32 %v1165
        %vm1172 = vmor %vm1170, %vm1171
        %v1173 = vsel %vm1172, %v1165, %v1169
        %v1174 = vand.u32 2147483647, %v993
        %vm1175 = vcmp.eq.f32.partialorder %v1174, 8.507059e+37
        %v1176 = vand.u32 %v993, 2147483648
        %v1177 = vor.u32 1.1754944e-38, %v1176
        %v1178 = vsel %vm1175, %v1177, %v1173
        %v1179 = vmul.f32 1.0, %v1178
        %v1180 = vrcp.pop %v994
        %v1181 = vmul.f32 %v994, %v1180
        %v1182 = vsub.f32 1.0, %v1181
        %v1183 = vmul.f32 %v1180, %v1182
        %v1184 = vadd.f32 %v1180, %v1183
        %vm1185 = vweird.f32 %v994
        %vm1186 = vweird.f32 %v1180
        %vm1187 = vmor %vm1185, %vm1186
        %v1188 = vsel %vm1187, %v1180, %v1184
        %v1189 = vand.u32 2147483647, %v994
        %vm1190 = vcmp.eq.f32.partialorder %v1189, 8.507059e+37
        %v1191 = vand.u32 %v994, 2147483648
        %v1192 = vor.u32 1.1754944e-38, %v1191
        %v1193 = vsel %vm1190, %v1192, %v1188
        %v1194 = vmul.f32 1.0, %v1193
        %v1195 = vrcp.pop %v995
        %v1196 = vmul.f32 %v995, %v1195
        %v1197 = vsub.f32 1.0, %v1196
        %v1198 = vmul.f32 %v1195, %v1197
        %v1199 = vadd.f32 %v1195, %v1198
        %vm1200 = vweird.f32 %v995
        %vm1201 = vweird.f32 %v1195
        %vm1202 = vmor %vm1200, %vm1201
        %v1203 = vsel %vm1202, %v1195, %v1199
        %v1204 = vand.u32 2147483647, %v995
        %vm1205 = vcmp.eq.f32.partialorder %v1204, 8.507059e+37
        %v1206 = vand.u32 %v995, 2147483648
        %v1207 = vor.u32 1.1754944e-38, %v1206
        %v1208 = vsel %vm1205, %v1207, %v1203
        %v1209 = vmul.f32 1.0, %v1208
        %v1210 = vrcp.pop %v996
        %v1211 = vmul.f32 %v996, %v1210
        %v1212 = vsub.f32 1.0, %v1211
        %v1213 = vmul.f32 %v1210, %v1212
        %v1214 = vadd.f32 %v1210, %v1213
        %vm1215 = vweird.f32 %v996
        %vm1216 = vweird.f32 %v1210
        %vm1217 = vmor %vm1215, %vm1216
        %v1218 = vsel %vm1217, %v1210, %v1214
        %v1219 = vand.u32 2147483647, %v996
        %vm1220 = vcmp.eq.f32.partialorder %v1219, 8.507059e+37
        %v1221 = vand.u32 %v996, 2147483648
        %v1222 = vor.u32 1.1754944e-38, %v1221
        %v1223 = vsel %vm1220, %v1222, %v1218
        %v1224 = vmul.f32 1.0, %v1223
        %v1225 = vrcp.pop %v997
        %v1226 = vmul.f32 %v997, %v1225
        %v1227 = vsub.f32 1.0, %v1226
        %v1228 = vmul.f32 %v1225, %v1227
        %v1229 = vadd.f32 %v1225, %v1228
        %vm1230 = vweird.f32 %v997
        %vm1231 = vweird.f32 %v1225
        %vm1232 = vmor %vm1230, %vm1231
        %v1233 = vsel %vm1232, %v1225, %v1229
        %v1234 = vand.u32 2147483647, %v997
        %vm1235 = vcmp.eq.f32.partialorder %v1234, 8.507059e+37
        %v1236 = vand.u32 %v997, 2147483648
        %v1237 = vor.u32 1.1754944e-38, %v1236
        %v1238 = vsel %vm1235, %v1237, %v1233
        %v1239 = vmul.f32 1.0, %v1238
        %v1240 = vrcp.pop %v998
        %v1241 = vmul.f32 %v998, %v1240
        %v1242 = vsub.f32 1.0, %v1241
        %v1243 = vmul.f32 %v1240, %v1242
        %v1244 = vadd.f32 %v1240, %v1243
        %vm1245 = vweird.f32 %v998
        %vm1246 = vweird.f32 %v1240
        %vm1247 = vmor %vm1245, %vm1246
        %v1248 = vsel %vm1247, %v1240, %v1244
        %v1249 = vand.u32 2147483647, %v998
        %vm1250 = vcmp.eq.f32.partialorder %v1249, 8.507059e+37
        %v1251 = vand.u32 %v998, 2147483648
        %v1252 = vor.u32 1.1754944e-38, %v1251
        %v1253 = vsel %vm1250, %v1252, %v1248
        %v1254 = vmul.f32 1.0, %v1253
        %v1255 = vrcp.pop %v999
        %v1256 = vmul.f32 %v999, %v1255
        %v1257 = vsub.f32 1.0, %v1256
        %v1258 = vmul.f32 %v1255, %v1257
        %v1259 = vadd.f32 %v1255, %v1258
        %vm1260 = vweird.f32 %v999
        %vm1261 = vweird.f32 %v1255
        %vm1262 = vmor %vm1260, %vm1261
        %v1263 = vsel %vm1262, %v1255, %v1259
        %v1264 = vand.u32 2147483647, %v999
        %vm1265 = vcmp.eq.f32.partialorder %v1264, 8.507059e+37
        %v1266 = vand.u32 %v999, 2147483648
        %v1267 = vor.u32 1.1754944e-38, %v1266
        %v1268 = vsel %vm1265, %v1267, %v1263
        %v1269 = vmul.f32 1.0, %v1268
        %v1270 = vrcp.pop %v1000
        %v1271 = vmul.f32 %v1000, %v1270
        %v1272 = vsub.f32 1.0, %v1271
        %v1273 = vmul.f32 %v1270, %v1272
        %v1274 = vadd.f32 %v1270, %v1273
        %vm1275 = vweird.f32 %v1000
        %vm1276 = vweird.f32 %v1270
        %vm1277 = vmor %vm1275, %vm1276
        %v1278 = vsel %vm1277, %v1270, %v1274
        %v1279 = vand.u32 2147483647, %v1000
        %vm1280 = vcmp.eq.f32.partialorder %v1279, 8.507059e+37
        %v1281 = vand.u32 %v1000, 2147483648
        %v1282 = vor.u32 1.1754944e-38, %v1281
        %v1283 = vsel %vm1280, %v1282, %v1278
        %v1284 = vmul.f32 1.0, %v1283
        %v1285 = vrcp.pop %v1001
        %v1286 = vmul.f32 %v1001, %v1285
        %v1287 = vsub.f32 1.0, %v1286
        %v1288 = vmul.f32 %v1285, %v1287
        %v1289 = vadd.f32 %v1285, %v1288
        %vm1290 = vweird.f32 %v1001
        %vm1291 = vweird.f32 %v1285
        %vm1292 = vmor %vm1290, %vm1291
        %v1293 = vsel %vm1292, %v1285, %v1289
        %v1294 = vand.u32 2147483647, %v1001
        %vm1295 = vcmp.eq.f32.partialorder %v1294, 8.507059e+37
        %v1296 = vand.u32 %v1001, 2147483648
        %v1297 = vor.u32 1.1754944e-38, %v1296
        %v1298 = vsel %vm1295, %v1297, %v1293
        %v1299 = vmul.f32 1.0, %v1298
        %v1300 = vrcp.pop %v1002
        %v1301 = vmul.f32 %v1002, %v1300
        %v1302 = vsub.f32 1.0, %v1301
        %v1303 = vmul.f32 %v1300, %v1302
        %v1304 = vadd.f32 %v1300, %v1303
        %vm1305 = vweird.f32 %v1002
        %vm1306 = vweird.f32 %v1300
        %vm1307 = vmor %vm1305, %vm1306
        %v1308 = vsel %vm1307, %v1300, %v1304
        %v1309 = vand.u32 2147483647, %v1002
        %vm1310 = vcmp.eq.f32.partialorder %v1309, 8.507059e+37
        %v1311 = vand.u32 %v1002, 2147483648
        %v1312 = vor.u32 1.1754944e-38, %v1311
        %v1313 = vsel %vm1310, %v1312, %v1308
        %v1314 = vmul.f32 1.0, %v1313
        %v1315 = vrcp.pop %v1003
        %v1316 = vmul.f32 %v1003, %v1315
        %v1317 = vsub.f32 1.0, %v1316
        %v1318 = vmul.f32 %v1315, %v1317
        %v1319 = vadd.f32 %v1315, %v1318
        %vm1320 = vweird.f32 %v1003
        %vm1321 = vweird.f32 %v1315
        %vm1322 = vmor %vm1320, %vm1321
        %v1323 = vsel %vm1322, %v1315, %v1319
        %v1324 = vand.u32 2147483647, %v1003
        %vm1325 = vcmp.eq.f32.partialorder %v1324, 8.507059e+37
        %v1326 = vand.u32 %v1003, 2147483648
        %v1327 = vor.u32 1.1754944e-38, %v1326
        %v1328 = vsel %vm1325, %v1327, %v1323
        %v1329 = vmul.f32 1.0, %v1328
        %v1330 = vrcp.pop %v1004
        %v1331 = vmul.f32 %v1004, %v1330
        %v1332 = vsub.f32 1.0, %v1331
        %v1333 = vmul.f32 %v1330, %v1332
        %v1334 = vadd.f32 %v1330, %v1333
        %vm1335 = vweird.f32 %v1004
        %vm1336 = vweird.f32 %v1330
        %vm1337 = vmor %vm1335, %vm1336
        %v1338 = vsel %vm1337, %v1330, %v1334
        %v1339 = vand.u32 2147483647, %v1004
        %vm1340 = vcmp.eq.f32.partialorder %v1339, 8.507059e+37
        %v1341 = vand.u32 %v1004, 2147483648
        %v1342 = vor.u32 1.1754944e-38, %v1341
        %v1343 = vsel %vm1340, %v1342, %v1338
        %v1344 = vmul.f32 1.0, %v1343
        %v1345 = vrcp.pop %v1005
        %v1346 = vmul.f32 %v1005, %v1345
        %v1347 = vsub.f32 1.0, %v1346
        %v1348 = vmul.f32 %v1345, %v1347
        %v1349 = vadd.f32 %v1345, %v1348
        %vm1350 = vweird.f32 %v1005
        %vm1351 = vweird.f32 %v1345
        %vm1352 = vmor %vm1350, %vm1351
        %v1353 = vsel %vm1352, %v1345, %v1349
        %v1354 = vand.u32 2147483647, %v1005
        %vm1355 = vcmp.eq.f32.partialorder %v1354, 8.507059e+37
        %v1356 = vand.u32 %v1005, 2147483648
        %v1357 = vor.u32 1.1754944e-38, %v1356
        %v1358 = vsel %vm1355, %v1357, %v1353
        %v1359 = vmul.f32 1.0, %v1358
        %v1360 = vrcp.pop %v1006
        %v1361 = vmul.f32 %v1006, %v1360
        %v1362 = vsub.f32 1.0, %v1361
        %v1363 = vmul.f32 %v1360, %v1362
        %v1364 = vadd.f32 %v1360, %v1363
        %vm1365 = vweird.f32 %v1006
        %vm1366 = vweird.f32 %v1360
        %vm1367 = vmor %vm1365, %vm1366
        %v1368 = vsel %vm1367, %v1360, %v1364
        %v1369 = vand.u32 2147483647, %v1006
        %vm1370 = vcmp.eq.f32.partialorder %v1369, 8.507059e+37
        %v1371 = vand.u32 %v1006, 2147483648
        %v1372 = vor.u32 1.1754944e-38, %v1371
        %v1373 = vsel %vm1370, %v1372, %v1368
        %v1374 = vmul.f32 1.0, %v1373
        %v1375 = vrcp.pop %v1007
        %v1376 = vmul.f32 %v1007, %v1375
        %v1377 = vsub.f32 1.0, %v1376
        %v1378 = vmul.f32 %v1375, %v1377
        %v1379 = vadd.f32 %v1375, %v1378
        %vm1380 = vweird.f32 %v1007
        %vm1381 = vweird.f32 %v1375
        %vm1382 = vmor %vm1380, %vm1381
        %v1383 = vsel %vm1382, %v1375, %v1379
        %v1384 = vand.u32 2147483647, %v1007
        %vm1385 = vcmp.eq.f32.partialorder %v1384, 8.507059e+37
        %v1386 = vand.u32 %v1007, 2147483648
        %v1387 = vor.u32 1.1754944e-38, %v1386
        %v1388 = vsel %vm1385, %v1387, %v1383
        %v1389 = vmul.f32 1.0, %v1388
        %v1390 = vrcp.pop %v1008
        %v1391 = vmul.f32 %v1008, %v1390
        %v1392 = vsub.f32 1.0, %v1391
        %v1393 = vmul.f32 %v1390, %v1392
        %v1394 = vadd.f32 %v1390, %v1393
        %vm1395 = vweird.f32 %v1008
        %vm1396 = vweird.f32 %v1390
        %vm1397 = vmor %vm1395, %vm1396
        %v1398 = vsel %vm1397, %v1390, %v1394
        %v1399 = vand.u32 2147483647, %v1008
        %vm1400 = vcmp.eq.f32.partialorder %v1399, 8.507059e+37
        %v1401 = vand.u32 %v1008, 2147483648
        %v1402 = vor.u32 1.1754944e-38, %v1401
        %v1403 = vsel %vm1400, %v1402, %v1398
        %v1404 = vmul.f32 1.0, %v1403
        %v1405 = vrcp.pop %v1009
        %v1406 = vmul.f32 %v1009, %v1405
        %v1407 = vsub.f32 1.0, %v1406
        %v1408 = vmul.f32 %v1405, %v1407
        %v1409 = vadd.f32 %v1405, %v1408
        %vm1410 = vweird.f32 %v1009
        %vm1411 = vweird.f32 %v1405
        %vm1412 = vmor %vm1410, %vm1411
        %v1413 = vsel %vm1412, %v1405, %v1409
        %v1414 = vand.u32 2147483647, %v1009
        %vm1415 = vcmp.eq.f32.partialorder %v1414, 8.507059e+37
        %v1416 = vand.u32 %v1009, 2147483648
        %v1417 = vor.u32 1.1754944e-38, %v1416
        %v1418 = vsel %vm1415, %v1417, %v1413
        %v1419 = vmul.f32 1.0, %v1418
        %v1420 = vrcp.pop %v1010
        %v1421 = vmul.f32 %v1010, %v1420
        %v1422 = vsub.f32 1.0, %v1421
        %v1423 = vmul.f32 %v1420, %v1422
        %v1424 = vadd.f32 %v1420, %v1423
        %vm1425 = vweird.f32 %v1010
        %vm1426 = vweird.f32 %v1420
        %vm1427 = vmor %vm1425, %vm1426
        %v1428 = vsel %vm1427, %v1420, %v1424
        %v1429 = vand.u32 2147483647, %v1010
        %vm1430 = vcmp.eq.f32.partialorder %v1429, 8.507059e+37
        %v1431 = vand.u32 %v1010, 2147483648
        %v1432 = vor.u32 1.1754944e-38, %v1431
        %v1433 = vsel %vm1430, %v1432, %v1428
        %v1434 = vmul.f32 1.0, %v1433
        %v1435 = vrcp.pop %v1011
        %v1436 = vmul.f32 %v1011, %v1435
        %v1437 = vsub.f32 1.0, %v1436
        %v1438 = vmul.f32 %v1435, %v1437
        %v1439 = vadd.f32 %v1435, %v1438
        %vm1440 = vweird.f32 %v1011
        %vm1441 = vweird.f32 %v1435
        %vm1442 = vmor %vm1440, %vm1441
        %v1443 = vsel %vm1442, %v1435, %v1439
        %v1444 = vand.u32 2147483647, %v1011
        %vm1445 = vcmp.eq.f32.partialorder %v1444, 8.507059e+37
        %v1446 = vand.u32 %v1011, 2147483648
        %v1447 = vor.u32 1.1754944e-38, %v1446
        %v1448 = vsel %vm1445, %v1447, %v1443
        %v1449 = vmul.f32 1.0, %v1448
        %v1450 = vrcp.pop %v1012
        %v1451 = vmul.f32 %v1012, %v1450
        %v1452 = vsub.f32 1.0, %v1451
        %v1453 = vmul.f32 %v1450, %v1452
        %v1454 = vadd.f32 %v1450, %v1453
        %vm1455 = vweird.f32 %v1012
        %vm1456 = vweird.f32 %v1450
        %vm1457 = vmor %vm1455, %vm1456
        %v1458 = vsel %vm1457, %v1450, %v1454
        %v1459 = vand.u32 2147483647, %v1012
        %vm1460 = vcmp.eq.f32.partialorder %v1459, 8.507059e+37
        %v1461 = vand.u32 %v1012, 2147483648
        %v1462 = vor.u32 1.1754944e-38, %v1461
        %v1463 = vsel %vm1460, %v1462, %v1458
        %v1464 = vmul.f32 1.0, %v1463
        %v1465 = vrcp.pop %v1013
        %v1466 = vmul.f32 %v1013, %v1465
        %v1467 = vsub.f32 1.0, %v1466
        %v1468 = vmul.f32 %v1465, %v1467
        %v1469 = vadd.f32 %v1465, %v1468
        %vm1470 = vweird.f32 %v1013
        %vm1471 = vweird.f32 %v1465
        %vm1472 = vmor %vm1470, %vm1471
        %v1473 = vsel %vm1472, %v1465, %v1469
        %v1474 = vand.u32 2147483647, %v1013
        %vm1475 = vcmp.eq.f32.partialorder %v1474, 8.507059e+37
        %v1476 = vand.u32 %v1013, 2147483648
        %v1477 = vor.u32 1.1754944e-38, %v1476
        %v1478 = vsel %vm1475, %v1477, %v1473
        %v1479 = vmul.f32 1.0, %v1478
        %v1480 = vrcp.pop %v1014
        %v1481 = vmul.f32 %v1014, %v1480
        %v1482 = vsub.f32 1.0, %v1481
        %v1483 = vmul.f32 %v1480, %v1482
        %v1484 = vadd.f32 %v1480, %v1483
        %vm1485 = vweird.f32 %v1014
        %vm1486 = vweird.f32 %v1480
        %vm1487 = vmor %vm1485, %vm1486
        %v1488 = vsel %vm1487, %v1480, %v1484
        %v1489 = vand.u32 2147483647, %v1014
        %vm1490 = vcmp.eq.f32.partialorder %v1489, 8.507059e+37
        %v1491 = vand.u32 %v1014, 2147483648
        %v1492 = vor.u32 1.1754944e-38, %v1491
        %v1493 = vsel %vm1490, %v1492, %v1488
        %v1494 = vmul.f32 1.0, %v1493
        %v1495 = vmul.f32 %v855, %v1029
        %v1496 = vmul.f32 %v856, %v1044
        %v1497 = vmul.f32 %v857, %v1059
        %v1498 = vmul.f32 %v858, %v1074
        %v1499 = vmul.f32 %v859, %v1089
        %v1500 = vmul.f32 %v860, %v1104
        %v1501 = vmul.f32 %v861, %v1119
        %v1502 = vmul.f32 %v862, %v1134
        %v1503 = vmul.f32 %v863, %v1149
        %v1504 = vmul.f32 %v864, %v1164
        %v1505 = vmul.f32 %v865, %v1179
        %v1506 = vmul.f32 %v866, %v1194
        %v1507 = vmul.f32 %v867, %v1209
        %v1508 = vmul.f32 %v868, %v1224
        %v1509 = vmul.f32 %v869, %v1239
        %v1510 = vmul.f32 %v870, %v1254
        %v1511 = vmul.f32 %v871, %v1269
        %v1512 = vmul.f32 %v872, %v1284
        %v1513 = vmul.f32 %v873, %v1299
        %v1514 = vmul.f32 %v874, %v1314
        %v1515 = vmul.f32 %v875, %v1329
        %v1516 = vmul.f32 %v876, %v1344
        %v1517 = vmul.f32 %v877, %v1359
        %v1518 = vmul.f32 %v878, %v1374
        %v1519 = vmul.f32 %v879, %v1389
        %v1520 = vmul.f32 %v880, %v1404
        %v1521 = vmul.f32 %v881, %v1419
        %v1522 = vmul.f32 %v882, %v1434
        %v1523 = vmul.f32 %v883, %v1449
        %v1524 = vmul.f32 %v884, %v1464
        %v1525 = vmul.f32 %v885, %v1479
        %v1526 = vmul.f32 %v886, %v1494
        %v1527 = vld [vmem:[%s3] sm:$0x1]
        %v1529 = vperm.slane %v1527, 0
        %v1531 = vmul.f32 %v1495, %v1529
        %v1532 = vmul.f32 %v1496, %v1529
        %v1533 = vmul.f32 %v1497, %v1529
        %v1534 = vmul.f32 %v1498, %v1529
        %v1535 = vmul.f32 %v1499, %v1529
        %v1536 = vmul.f32 %v1500, %v1529
        %v1537 = vmul.f32 %v1501, %v1529
        %v1538 = vmul.f32 %v1502, %v1529
        %v1539 = vmul.f32 %v1503, %v1529
        %v1540 = vmul.f32 %v1504, %v1529
        %v1541 = vmul.f32 %v1505, %v1529
        %v1542 = vmul.f32 %v1506, %v1529
        %v1543 = vmul.f32 %v1507, %v1529
        %v1544 = vmul.f32 %v1508, %v1529
        %v1545 = vmul.f32 %v1509, %v1529
        %v1546 = vmul.f32 %v1510, %v1529
        %v1547 = vmul.f32 %v1511, %v1529
        %v1548 = vmul.f32 %v1512, %v1529
        %v1549 = vmul.f32 %v1513, %v1529
        %v1550 = vmul.f32 %v1514, %v1529
        %v1551 = vmul.f32 %v1515, %v1529
        %v1552 = vmul.f32 %v1516, %v1529
        %v1553 = vmul.f32 %v1517, %v1529
        %v1554 = vmul.f32 %v1518, %v1529
        %v1555 = vmul.f32 %v1519, %v1529
        %v1556 = vmul.f32 %v1520, %v1529
        %v1557 = vmul.f32 %v1521, %v1529
        %v1558 = vmul.f32 %v1522, %v1529
        %v1559 = vmul.f32 %v1523, %v1529
        %v1560 = vmul.f32 %v1524, %v1529
        %v1561 = vmul.f32 %v1525, %v1529
        %v1562 = vmul.f32 %v1526, %v1529
        %1563 = vadd.xlane.f32.xlu0 %v1531
        %v1564 = vpop.xlane.xlu0 %1563
        %1565 = vadd.xlane.f32.xlu0 %v1532
        %v1566 = vpop.xlane.xlu0 %1565
        %1567 = vadd.xlane.f32.xlu0 %v1533
        %v1568 = vpop.xlane.xlu0 %1567
        %1569 = vadd.xlane.f32.xlu0 %v1534
        %v1570 = vpop.xlane.xlu0 %1569
        %1571 = vadd.xlane.f32.xlu0 %v1535
        %v1572 = vpop.xlane.xlu0 %1571
        %1573 = vadd.xlane.f32.xlu0 %v1536
        %v1574 = vpop.xlane.xlu0 %1573
        %1575 = vadd.xlane.f32.xlu0 %v1537
        %v1576 = vpop.xlane.xlu0 %1575
        %1577 = vadd.xlane.f32.xlu0 %v1538
        %v1578 = vpop.xlane.xlu0 %1577
        %1579 = vadd.xlane.f32.xlu0 %v1539
        %v1580 = vpop.xlane.xlu0 %1579
        %1581 = vadd.xlane.f32.xlu0 %v1540
        %v1582 = vpop.xlane.xlu0 %1581
        %1583 = vadd.xlane.f32.xlu0 %v1541
        %v1584 = vpop.xlane.xlu0 %1583
        %1585 = vadd.xlane.f32.xlu0 %v1542
        %v1586 = vpop.xlane.xlu0 %1585
        %1587 = vadd.xlane.f32.xlu0 %v1543
        %v1588 = vpop.xlane.xlu0 %1587
        %1589 = vadd.xlane.f32.xlu0 %v1544
        %v1590 = vpop.xlane.xlu0 %1589
        %1591 = vadd.xlane.f32.xlu0 %v1545
        %v1592 = vpop.xlane.xlu0 %1591
        %1593 = vadd.xlane.f32.xlu0 %v1546
        %v1594 = vpop.xlane.xlu0 %1593
        %1595 = vadd.xlane.f32.xlu0 %v1547
        %v1596 = vpop.xlane.xlu0 %1595
        %1597 = vadd.xlane.f32.xlu0 %v1548
        %v1598 = vpop.xlane.xlu0 %1597
        %1599 = vadd.xlane.f32.xlu0 %v1549
        %v1600 = vpop.xlane.xlu0 %1599
        %1601 = vadd.xlane.f32.xlu0 %v1550
        %v1602 = vpop.xlane.xlu0 %1601
        %1603 = vadd.xlane.f32.xlu0 %v1551
        %v1604 = vpop.xlane.xlu0 %1603
        %1605 = vadd.xlane.f32.xlu0 %v1552
        %v1606 = vpop.xlane.xlu0 %1605
        %1607 = vadd.xlane.f32.xlu0 %v1553
        %v1608 = vpop.xlane.xlu0 %1607
        %1609 = vadd.xlane.f32.xlu0 %v1554
        %v1610 = vpop.xlane.xlu0 %1609
        %1611 = vadd.xlane.f32.xlu0 %v1555
        %v1612 = vpop.xlane.xlu0 %1611
        %1613 = vadd.xlane.f32.xlu0 %v1556
        %v1614 = vpop.xlane.xlu0 %1613
        %1615 = vadd.xlane.f32.xlu0 %v1557
        %v1616 = vpop.xlane.xlu0 %1615
        %1617 = vadd.xlane.f32.xlu0 %v1558
        %v1618 = vpop.xlane.xlu0 %1617
        %1619 = vadd.xlane.f32.xlu0 %v1559
        %v1620 = vpop.xlane.xlu0 %1619
        %1621 = vadd.xlane.f32.xlu0 %v1560
        %v1622 = vpop.xlane.xlu0 %1621
        %1623 = vadd.xlane.f32.xlu0 %v1561
        %v1624 = vpop.xlane.xlu0 %1623
        %1625 = vadd.xlane.f32.xlu0 %v1562
        %v1626 = vpop.xlane.xlu0 %1625
        %v1627 = vld [vmem:[#allocation2] sm:$0x1]
        %v1629 = vperm.slane %v1627, 0
        %v1631 = vadd.f32 %v1564, %v1629
        %v1632 = vadd.f32 %v1566, %v1629
        %v1633 = vadd.f32 %v1568, %v1629
        %v1634 = vadd.f32 %v1570, %v1629
        %v1635 = vadd.f32 %v1572, %v1629
        %v1636 = vadd.f32 %v1574, %v1629
        %v1637 = vadd.f32 %v1576, %v1629
        %v1638 = vadd.f32 %v1578, %v1629
        %v1639 = vadd.f32 %v1580, %v1629
        %v1640 = vadd.f32 %v1582, %v1629
        %v1641 = vadd.f32 %v1584, %v1629
        %v1642 = vadd.f32 %v1586, %v1629
        %v1643 = vadd.f32 %v1588, %v1629
        %v1644 = vadd.f32 %v1590, %v1629
        %v1645 = vadd.f32 %v1592, %v1629
        %v1646 = vadd.f32 %v1594, %v1629
        %v1647 = vadd.f32 %v1596, %v1629
        %v1648 = vadd.f32 %v1598, %v1629
        %v1649 = vadd.f32 %v1600, %v1629
        %v1650 = vadd.f32 %v1602, %v1629
        %v1651 = vadd.f32 %v1604, %v1629
        %v1652 = vadd.f32 %v1606, %v1629
        %v1653 = vadd.f32 %v1608, %v1629
        %v1654 = vadd.f32 %v1610, %v1629
        %v1655 = vadd.f32 %v1612, %v1629
        %v1656 = vadd.f32 %v1614, %v1629
        %v1657 = vadd.f32 %v1616, %v1629
        %v1658 = vadd.f32 %v1618, %v1629
        %v1659 = vadd.f32 %v1620, %v1629
        %v1660 = vadd.f32 %v1622, %v1629
        %v1661 = vadd.f32 %v1624, %v1629
        %v1662 = vadd.f32 %v1626, %v1629
        %vm1663 = vcmask 7168
        %1664 = vst.msk [vmem:[%s267] sm:$0xff] %vm1663, %v1631
        %1665 = vst.msk [vmem:[%s267 + $0x8] sm:$0xff] %vm1663, %v1632
        %1666 = vst.msk [vmem:[%s267 + $0x10] sm:$0xff] %vm1663, %v1633
        %1667 = vst.msk [vmem:[%s267 + $0x18] sm:$0xff] %vm1663, %v1634
        %1668 = vst.msk [vmem:[%s267 + $0x20] sm:$0xff] %vm1663, %v1635
        %1669 = vst.msk [vmem:[%s267 + $0x28] sm:$0xff] %vm1663, %v1636
        %1670 = vst.msk [vmem:[%s267 + $0x30] sm:$0xff] %vm1663, %v1637
        %1671 = vst.msk [vmem:[%s267 + $0x38] sm:$0xff] %vm1663, %v1638
        %1672 = vst.msk [vmem:[%s267 + $0x40] sm:$0xff] %vm1663, %v1639
        %1673 = vst.msk [vmem:[%s267 + $0x48] sm:$0xff] %vm1663, %v1640
        %1674 = vst.msk [vmem:[%s267 + $0x50] sm:$0xff] %vm1663, %v1641
        %1675 = vst.msk [vmem:[%s267 + $0x58] sm:$0xff] %vm1663, %v1642
        %1676 = vst.msk [vmem:[%s267 + $0x60] sm:$0xff] %vm1663, %v1643
        %1677 = vst.msk [vmem:[%s267 + $0x68] sm:$0xff] %vm1663, %v1644
        %1678 = vst.msk [vmem:[%s267 + $0x70] sm:$0xff] %vm1663, %v1645
        %1679 = vst.msk [vmem:[%s267 + $0x78] sm:$0xff] %vm1663, %v1646
        %1680 = vst.msk [vmem:[%s267 + $0x80] sm:$0xff] %vm1663, %v1647
        %1681 = vst.msk [vmem:[%s267 + $0x88] sm:$0xff] %vm1663, %v1648
        %1682 = vst.msk [vmem:[%s267 + $0x90] sm:$0xff] %vm1663, %v1649
        %1683 = vst.msk [vmem:[%s267 + $0x98] sm:$0xff] %vm1663, %v1650
        %1684 = vst.msk [vmem:[%s267 + $0xa0] sm:$0xff] %vm1663, %v1651
        %1685 = vst.msk [vmem:[%s267 + $0xa8] sm:$0xff] %vm1663, %v1652
        %1686 = vst.msk [vmem:[%s267 + $0xb0] sm:$0xff] %vm1663, %v1653
        %1687 = vst.msk [vmem:[%s267 + $0xb8] sm:$0xff] %vm1663, %v1654
        %1688 = vst.msk [vmem:[%s267 + $0xc0] sm:$0xff] %vm1663, %v1655
        %1689 = vst.msk [vmem:[%s267 + $0xc8] sm:$0xff] %vm1663, %v1656
        %1690 = vst.msk [vmem:[%s267 + $0xd0] sm:$0xff] %vm1663, %v1657
        %1691 = vst.msk [vmem:[%s267 + $0xd8] sm:$0xff] %vm1663, %v1658
        %1692 = vst.msk [vmem:[%s267 + $0xe0] sm:$0xff] %vm1663, %v1659
        %1693 = vst.msk [vmem:[%s267 + $0xe8] sm:$0xff] %vm1663, %v1660
        %1694 = vst.msk [vmem:[%s267 + $0xf0] sm:$0xff] %vm1663, %v1661
        %1695 = vst.msk [vmem:[%s267 + $0xf8] sm:$0xff] %vm1663, %v1662
        %s1696 = smul.u32 32, %s22
        %p1697 = scmp.lt.s32.totalorder %s1696, 63
        %s1698 = scalar_select %p1697, %s1696, 63
        %s1699 = smul.addr %s1698, 8
        %s1700 = scalar_lea.vmem %s5, %s1699
        // Predicated region
        $region49: #{tpu_custom_call.1} parent=39 // pred_check
          %p1701 = pneg %p150
        $region50: #{tpu_custom_call.1} parent=39 // pred_check_branch
          %1703 = sbr.rel (%p1701) target = $region52
        $region51: #{tpu_custom_call.1} parent=39 // pred_region
          %s1704 = smul.u32 32, %s22
        $region52: #{tpu_custom_call.1} parent=39 // pred_fallthru
          _
      $region40: #{tpu_custom_call.1} parent=5 // pred_fallthru
        _
      %p1705 = scmp.le.s32.totalorder 2, %s17
      // Predicated region
      $region53: #{tpu_custom_call.1} parent=5 // pred_check
        %p1706 = pneg %p1705
      $region54: #{tpu_custom_call.1} parent=5 // pred_check_branch
        %1708 = sbr.rel (%p1706) target = $region56
      $region55: #{tpu_custom_call.1} parent=5 // pred_region
        %s1709 = ssub.s32 %s17, 2
        // Predicated region
        $region57: #{tpu_custom_call.1} parent=55 // pred_check
          %p1710 = pneg %p156
        $region58: #{tpu_custom_call.1} parent=55 // pred_check_branch
          %1712 = sbr.rel (%p1710) target = $region60
        $region59: #{tpu_custom_call.1} parent=55 // pred_region
          %s1713 = smul.u32 32, %s23
          %p1714 = scmp.lt.s32.totalorder %s1713, 63
          %s1715 = scalar_select %p1714, %s1713, 63
          %s1716 = smul.addr %s1715, 8
          %s1717 = scalar_lea.vmem %s5, %s1716
        $region60: #{tpu_custom_call.1} parent=55 // pred_fallthru
          _
      $region56: #{tpu_custom_call.1} parent=5 // pred_fallthru
        _
    $region6: #{tpu_custom_call.1} parent=1 // loop_footer
      %s21 = sadd.s32 1, %s17
    $region7: #{tpu_custom_call.1} parent=1 // loop_footer_branch
      %16 = sbr.rel target = $region3
    $region8: #{tpu_custom_call.1} parent=1 // loop_exit
      _
    %1718 = vsyncpa [#allocation4], 1
    %s1719 = scalar_lea.sflag [#allocation4], 1
    %1720 = vsyncpa %s1719, 1
    %1721 = vsyncpa [#allocation6], 1

</llo_original>
